<compile_context>
chip_gen: v5e
topology: v5e:2x2
jax: 0.10.0
libtpu: 0.0.40
codegen_flags: <defaults>
</compile_context>

<pallas_src>
import functools

import jax
import jax.numpy as jnp
import numpy as np
from jax.experimental import pallas as pl
from jax.experimental.pallas import tpu as pltpu


_VMEM_LIMIT_BYTES = 32 * 1024 * 1024          # explicit scoped-VMEM limit (ok on v5e/v6e/v7x)
_WEIGHT_TILE_BUDGET = 8 * 1024 * 1024         # budget for the double-buffered weight block


# ---------------------------------------------------------------------------
# Fused (X @ W + b) -> optional ReLU matmul kernel (accumulate in f32 scratch)
# ---------------------------------------------------------------------------
def _linear_kernel(x_ref, w_ref, b_ref, o_ref, acc_ref, *, activation):
    k = pl.program_id(1)

    @pl.when(k == 0)
    def _():
        acc_ref[...] = jnp.zeros_like(acc_ref)

    acc_ref[...] += jnp.dot(x_ref[...], w_ref[...],
                            preferred_element_type=jnp.float32)

    @pl.when(k == pl.num_programs(1) - 1)
    def _():
        y = acc_ref[...] + b_ref[...]
        if activation == "relu":
            y = jnp.maximum(y, 0.0)
        o_ref[...] = y.astype(o_ref.dtype)


def _tile(dim, cap):
    """Largest multiple of 128 that divides `dim` and is <= cap, else full dim."""
    if dim <= cap:
        return dim
    t = (min(cap, dim) // 128) * 128
    while t >= 128:
        if dim % t == 0:
            return t
        t -= 128
    return dim


def pallas_linear(x, w, b, activation=None):
    """act(x @ w + b).  x: (M, K), w: (K, N)  (f32 or bf16, NOT upcast here), b: (N,)."""
    M, K = x.shape
    Kw, N = w.shape
    assert K == Kw and b.shape == (N,)

    tn = _tile(N, 512)
    # Keep the double-buffered weight block within budget (guards v7x 64 MiB VMEM),
    # and keep at least a few K steps for pipelining overlap.
    tk_cap = max(128, _WEIGHT_TILE_BUDGET // (2 * tn * w.dtype.itemsize))
    tk = _tile(K, min(tk_cap, 3200))
    grid = (N // tn, K // tk)                 # reduction axis last

    # TODO(synk): optional sweep — pipeline_mode=pl.Buffered(3) on the weight spec.
    return pl.pallas_call(
        functools.partial(_linear_kernel, activation=activation),
        out_shape=jax.ShapeDtypeStruct((M, N), jnp.float32),
        grid_spec=pltpu.PrefetchScalarGridSpec(
            num_scalar_prefetch=0,
            grid=grid,
            in_specs=[
                pl.BlockSpec((M, tk), lambda n, k: (0, k)),
                pl.BlockSpec((tk, tn), lambda n, k: (k, n)),
                pl.BlockSpec((1, tn), lambda n, k: (0, n)),
            ],
            out_specs=pl.BlockSpec((M, tn), lambda n, k: (0, n)),
            scratch_shapes=[pltpu.VMEM((M, tn), jnp.float32)],
        ),
        compiler_params=pltpu.CompilerParams(
            dimension_semantics=("parallel", "arbitrary"),   # N tiles across v7x cores
            vmem_limit_bytes=_VMEM_LIMIT_BYTES),
    )(x, w, b.reshape(1, N).astype(jnp.float32))


# ---------------------------------------------------------------------------
# Conv + BatchNorm(eval) + ReLU via im2col + the fused matmul kernel.
# Cout is padded to 128 so the Pallas output stores are lane-dense.
# ---------------------------------------------------------------------------
def _im2col(x_nhwc, k, stride, pad):
    xp = jnp.pad(x_nhwc, ((0, 0), (pad, pad), (pad, pad), (0, 0)))
    B, H, W, C = xp.shape
    Ho = (H - k) // stride + 1
    Wo = (W - k) // stride + 1
    cols = []
    for di in range(k):
        for dj in range(k):
            cols.append(xp[:, di:di + stride * Ho:stride,
                           dj:dj + stride * Wo:stride, :])
    patches = jnp.concatenate(cols, axis=-1)              # (B, Ho, Wo, k*k*C)
    return patches.reshape(B * Ho * Wo, k * k * C), (B, Ho, Wo)


def conv_bn_relu(x_nhwc, w_oihw, b, gamma, beta, stride, pad, eps=1e-5):
    # BatchNorm2d in eval mode with default running stats (mean=0, var=1) folded
    # into conv weight/bias so conv+BN+ReLU is one fused matmul.
    # TODO(synk): fold the actual running_mean/running_var for trained checkpoints.
    scale = gamma / jnp.sqrt(1.0 + eps)
    w_f = w_oihw * scale[:, None, None, None]
    b_f = b * scale + beta
    cout, cin, kh, kw = w_oihw.shape
    # im2col column order is (kh, kw, cin) -> reorder weights to match
    w_mat = jnp.transpose(w_f, (2, 3, 1, 0)).reshape(kh * kw * cin, cout)
    cpad = (-cout) % 128                                   # lane-dense output GEMM
    if cpad:
        w_mat = jnp.pad(w_mat, ((0, 0), (0, cpad)))
        b_f = jnp.pad(b_f, ((0, cpad),))
    patches, (B, Ho, Wo) = _im2col(x_nhwc, kh, stride, pad)
    y = pallas_linear(patches, w_mat, b_f, activation="relu")
    return y[:, :cout].reshape(B, Ho, Wo, cout)


# ---------------------------------------------------------------------------
# Fused LSTM-cell (single step, zero initial state) + dueling heads + combine.
# One pallas_call replaces the LSTM nonlinearity, 4 head matmuls and the
# dueling combine (all tiny, whole arrays fit VMEM).
# ---------------------------------------------------------------------------
def _head_kernel(gates_ref, wv1_ref, bv1_ref, wa1_ref, ba1_ref,
                 wv2_ref, bv2_ref, wa2_ref, ba2_ref, o_ref, *, hidden):
    H = hidden
    g = gates_ref[...]                                     # (B, 4H), PyTorch order i,f,g,o
    i_g = jax.nn.sigmoid(g[:, 0:H])
    g_g = jnp.tanh(g[:, 2 * H:3 * H])
    o_g = jax.nn.sigmoid(g[:, 3 * H:4 * H])
    # f-gate is multiplied by c_0 == 0 and therefore unused (seq_len = 1).
    h = o_g * jnp.tanh(i_g * g_g)                          # (B, H) == lstm_out[:, -1, :]

    hv = jnp.maximum(jnp.dot(h, wv1_ref[...],
                             preferred_element_type=jnp.float32) + bv1_ref[...], 0.0)
    ha = jnp.maximum(jnp.dot(h, wa1_ref[...],
                             preferred_element_type=jnp.float32) + ba1_ref[...], 0.0)
    value = jnp.dot(hv, wv2_ref[...], preferred_element_type=jnp.float32) + bv2_ref[...]
    adv = jnp.dot(ha, wa2_ref[...], preferred_element_type=jnp.float32) + ba2_ref[...]
    # PyTorch: value + advantages - advantages.mean()  (mean over ALL elements)
    o_ref[...] = value + adv - jnp.mean(adv, keepdims=True)


def lstm_dueling_head(gates, wv1, bv1, wa1, ba1, wv2, bv2, wa2, ba2, *, hidden):
    B = gates.shape[0]
    A = wa2.shape[1]
    args = [gates, wv1, bv1.reshape(1, -1), wa1, ba1.reshape(1, -1),
            wv2, bv2.reshape(1, -1), wa2, ba2.reshape(1, -1)]
    args = [a.astype(jnp.float32) for a in args]
    in_specs = [pl.BlockSpec(a.shape, lambda i: (0, 0)) for a in args]
    return pl.pallas_call(
        functools.partial(_head_kernel, hidden=hidden),
        out_shape=jax.ShapeDtypeStruct((B, A), jnp.float32),
        grid_spec=pltpu.PrefetchScalarGridSpec(
            num_scalar_prefetch=0,
            grid=(1,),
            in_specs=in_specs,
            out_specs=pl.BlockSpec((B, A), lambda i: (0, 0)),
        ),
        compiler_params=pltpu.CompilerParams(vmem_limit_bytes=_VMEM_LIMIT_BYTES),
    )(*args)


# ---------------------------------------------------------------------------
# Parameters (deterministic synthetic init).  Linear/LSTM weights are stored in
# "math" layout (in_features, out_features); lstm_w_ih_t == weight_ih_l0.T and
# is kept in bfloat16 (half the HBM bytes on the dominant matmul).
# ---------------------------------------------------------------------------
def init_params(key, n_stack=4, hidden_dim=256, n_actions=6, feat=12800):
    keys = iter(jax.random.split(key, 24))

    def w_init(shape, fan_in):
        return jax.random.normal(next(keys), shape, jnp.float32) / np.sqrt(fan_in)

    def b_init(shape):
        return jax.random.normal(next(keys), shape, jnp.float32) * 0.01

    H = hidden_dim
    p = {}
    p["conv1_w"] = w_init((32, n_stack, 8, 8), n_stack * 64)
    p["conv1_b"] = b_init((32,))
    p["bn1_g"], p["bn1_b"] = jnp.ones((32,), jnp.float32), jnp.zeros((32,), jnp.float32)
    p["conv2_w"] = w_init((64, 32, 4, 4), 32 * 16)
    p["conv2_b"] = b_init((64,))
    p["bn2_g"], p["bn2_b"] = jnp.ones((64,), jnp.float32), jnp.zeros((64,), jnp.float32)
    p["conv3_w"] = w_init((128, 64, 3, 3), 64 * 9)
    p["conv3_b"] = b_init((128,))
    p["bn3_g"], p["bn3_b"] = jnp.ones((128,), jnp.float32), jnp.zeros((128,), jnp.float32)

    # Single-layer LSTM. gate order (i, f, g, o), PyTorch convention.
    p["lstm_w_ih_t"] = w_init((feat, 4 * H), feat).astype(jnp.bfloat16)   # bf16 stream
    p["lstm_b_ih"] = b_init((4 * H,))
    p["lstm_b_hh"] = b_init((4 * H,))
    # TODO(synk): weight_hh_l0 is irrelevant to this forward (seq_len=1, zero initial
    # state => W_hh @ h0 == 0); it is not stored / not used.

    p["val1_w"], p["val1_b"] = w_init((H, H), H), b_init((H,))
    p["val2_w"], p["val2_b"] = w_init((H, 1), H), b_init((1,))
    p["adv1_w"], p["adv1_b"] = w_init((H, H), H), b_init((H,))
    p["adv2_w"], p["adv2_b"] = w_init((H, n_actions), H), b_init((n_actions,))
    return p


# ---------------------------------------------------------------------------
# Full forward pass
# ---------------------------------------------------------------------------
def dqn_lstm_forward(params, x_nchw):
    p = params
    x = x_nchw.astype(jnp.float32)                  # x.float(); /255 folded into conv1 W
    x = jnp.transpose(x, (0, 2, 3, 1))              # NCHW -> NHWC for the conv kernels

    h = conv_bn_relu(x, p["conv1_w"] / 255.0, p["conv1_b"], p["bn1_g"], p["bn1_b"], 4, 2)
    h = conv_bn_relu(h, p["conv2_w"], p["conv2_b"], p["bn2_g"], p["bn2_b"], 2, 1)
    h = conv_bn_relu(h, p["conv3_w"], p["conv3_b"], p["bn3_g"], p["bn3_b"], 1, 1)

    B = h.shape[0]
    # x.view(B, -1) in PyTorch flattens NCHW -> (B, C*H*W) = (B, 12800)
    feat = jnp.transpose(h, (0, 3, 1, 2)).reshape(B, -1)

    # Single-step LSTM with zero initial state: gates = feat @ W_ih^T + b_ih + b_hh.
    # Weight is bf16 in HBM; cast the (tiny) activations to bf16 to use the MXU bf16 path.
    # NOTE: raising the batch fed here amortizes the ~26 MB weight stream (HBM-bound at B=2).
    gates = pallas_linear(feat.astype(jnp.bfloat16), p["lstm_w_ih_t"],
                          p["lstm_b_ih"] + p["lstm_b_hh"])

    # Fused LSTM-cell nonlinearity + dueling value/advantage heads + combine.
    return lstm_dueling_head(gates,
                             p["val1_w"], p["val1_b"],
                             p["adv1_w"], p["adv1_b"],
                             p["val2_w"], p["val2_b"],
                             p["adv2_w"], p["adv2_b"],
                             hidden=p["val1_w"].shape[0])


# ---------------------------------------------------------------------------
# Pure-JAX f32 reference (same eval-mode BN / single-step LSTM semantics)
# ---------------------------------------------------------------------------
def reference_forward(params, x_nchw):
    p, eps = params, 1e-5
    x = x_nchw.astype(jnp.float32) / 255.0

    def conv(x, w, b, s, pad):
        y = jax.lax.conv_general_dilated(
            x, w, (s, s), [(pad, pad), (pad, pad)],
            dimension_numbers=("NCHW", "OIHW", "NCHW"))
        return y + b[None, :, None, None]

    def bn(y, g, be):
        sc = g / jnp.sqrt(1.0 + eps)
        return y * sc[None, :, None, None] + be[None, :, None, None]

    h = jax.nn.relu(bn(conv(x, p["conv1_w"], p["conv1_b"], 4, 2), p["bn1_g"], p["bn1_b"]))
    h = jax.nn.relu(bn(conv(h, p["conv2_w"], p["conv2_b"], 2, 1), p["bn2_g"], p["bn2_b"]))
    h = jax.nn.relu(bn(conv(h, p["conv3_w"], p["conv3_b"], 1, 1), p["bn3_g"], p["bn3_b"]))
    feat = h.reshape(h.shape[0], -1)

    H = p["val1_b"].shape[0]
    gates = feat @ p["lstm_w_ih_t"].astype(jnp.float32) + p["lstm_b_ih"] + p["lstm_b_hh"]
    i_g = jax.nn.sigmoid(gates[:, 0:H])
    g_g = jnp.tanh(gates[:, 2 * H:3 * H])
    o_g = jax.nn.sigmoid(gates[:, 3 * H:4 * H])
    hl = o_g * jnp.tanh(i_g * g_g)

    hv = jax.nn.relu(hl @ p["val1_w"] + p["val1_b"])
    ha = jax.nn.relu(hl @ p["adv1_w"] + p["adv1_b"])
    value = hv @ p["val2_w"] + p["val2_b"]
    adv = ha @ p["adv2_w"] + p["adv2_b"]
    return value + adv - adv.mean()


if __name__ == "__main__":
    key = jax.random.PRNGKey(0)
    pkey, xkey = jax.random.split(key)
    N_STACK, HIDDEN_DIM, N_ACTIONS = 4, 256, 6      # cfg.N_STACK, cfg.head.HIDDEN_DIM

    params = init_params(pkey, N_STACK, HIDDEN_DIM, N_ACTIONS)
    # _get_conv_output_size uses an 84x84 dummy => conv features = 128*10*10 = 12800.
    x = jax.random.randint(xkey, (2, N_STACK, 84, 84), 0, 256,
                           dtype=jnp.int32).astype(jnp.uint8)

    q = jax.block_until_ready(dqn_lstm_forward(params, x))
    ref = jax.block_until_ready(reference_forward(params, x))

    assert q.shape == (2, N_ACTIONS) and bool(jnp.all(jnp.isfinite(q)))
    # bf16 weight storage for the 12800x1024 LSTM matmul => a slightly looser tolerance.
    np.testing.assert_allclose(np.asarray(q), np.asarray(ref), rtol=5e-2, atol=2e-2)
    print("KERNEL_OK")
</pallas_src>

<mosaic_0001>
module attributes {stable_mosaic.version = 11 : i64} {
  func.func @_linear_kernel(%arg0: i32, %arg1: i32, %arg2: memref<882x256xf32, #tpu.memory_space<vmem>>, %arg3: memref<256x128xf32, #tpu.memory_space<vmem>>, %arg4: memref<1x128xf32, #tpu.memory_space<vmem>>, %arg5: memref<882x128xf32, #tpu.memory_space<vmem>>, %arg6: memref<882x128xf32, #tpu.memory_space<vmem>>) attributes {dimension_semantics = [#tpu.dimension_semantics<parallel>, #tpu.dimension_semantics<arbitrary>], iteration_bounds = array<i64: 1, 1>, scalar_prefetch = 0 : i64, scratch_operands = 1 : i64, tpu.core_type = #tpu.core_type<tc>, window_params = [{transform_indices = @transform_0, window_bounds = array<i64: 882, 256>}, {transform_indices = @transform_1, window_bounds = array<i64: 256, 128>}, {transform_indices = @transform_2, window_bounds = array<i64: 1, 128>}, {transform_indices = @transform_3, window_bounds = array<i64: 882, 128>}]} {
    %c0_i32 = arith.constant 0 : i32
    %0 = arith.cmpi eq, %arg1, %c0_i32 : i32
    %1 = arith.extui %0 : i1 to i32
    %c0_i32_0 = arith.constant 0 : i32
    %2 = arith.cmpi ne, %1, %c0_i32_0 : i32
    scf.if %2 {
      %cst_10 = arith.constant 0.000000e+00 : f32
      %12 = vector.broadcast %cst_10 : f32 to vector<882x128xf32>
      %c0_11 = arith.constant 0 : index
      %c0_12 = arith.constant 0 : index
      %13 = vector.load %arg6[%c0_11, %c0_12] : memref<882x128xf32, #tpu.memory_space<vmem>>, vector<882x128xf32>
      tpu.vector_store %arg6[%c0_11, %c0_12], %12 {strides = array<i32>} : memref<882x128xf32, #tpu.memory_space<vmem>>, vector<882x128xf32>,
    } else {
    }
    %c0 = arith.constant 0 : index
    %c0_1 = arith.constant 0 : index
    %3 = vector.load %arg6[%c0, %c0_1] : memref<882x128xf32, #tpu.memory_space<vmem>>, vector<882x128xf32>
    %c0_2 = arith.constant 0 : index
    %c0_3 = arith.constant 0 : index
    %4 = vector.load %arg2[%c0_2, %c0_3] : memref<882x256xf32, #tpu.memory_space<vmem>>, vector<882x256xf32>
    %c0_4 = arith.constant 0 : index
    %c0_5 = arith.constant 0 : index
    %5 = vector.load %arg3[%c0_4, %c0_5] : memref<256x128xf32, #tpu.memory_space<vmem>>, vector<256x128xf32>
    %cst = arith.constant dense<0.000000e+00> : vector<882x128xf32>
    %6 = tpu.matmul %4, %5, %cst {dimension_numbers = #tpu.dot_dimension_numbers<[1], [0], [0], [1], [0, 0, 1, 1], [], []>} : vector<882x256xf32>, vector<256x128xf32>, vector<882x128xf32> -> vector<882x128xf32>
    %7 = arith.addf %3, %6 : vector<882x128xf32>
    %c0_6 = arith.constant 0 : index
    %c0_7 = arith.constant 0 : index
    %8 = vector.load %arg6[%c0_6, %c0_7] : memref<882x128xf32, #tpu.memory_space<vmem>>, vector<882x128xf32>
    tpu.vector_store %arg6[%c0_6, %c0_7], %7 {strides = array<i32>} : memref<882x128xf32, #tpu.memory_space<vmem>>, vector<882x128xf32>,
    %c0_i32_8 = arith.constant 0 : i32
    %9 = arith.cmpi eq, %arg1, %c0_i32_8 : i32
    %10 = arith.extui %9 : i1 to i32
    %c0_i32_9 = arith.constant 0 : i32
    %11 = arith.cmpi ne, %10, %c0_i32_9 : i32
    scf.if %11 {
      %c0_10 = arith.constant 0 : index
      %c0_11 = arith.constant 0 : index
      %12 = vector.load %arg6[%c0_10, %c0_11] : memref<882x128xf32, #tpu.memory_space<vmem>>, vector<882x128xf32>
      %c0_12 = arith.constant 0 : index
      %c0_13 = arith.constant 0 : index
      %13 = vector.load %arg4[%c0_12, %c0_13] : memref<1x128xf32, #tpu.memory_space<vmem>>, vector<1x128xf32>
      %14 = vector.broadcast %13 : vector<1x128xf32> to vector<882x128xf32>
      %15 = arith.addf %12, %14 : vector<882x128xf32>
      %cst_14 = arith.constant 0.000000e+00 : f32
      %16 = vector.broadcast %cst_14 : f32 to vector<882x128xf32>
      %17 = arith.maximumf %15, %16 : vector<882x128xf32>
      %c0_15 = arith.constant 0 : index
      %c0_16 = arith.constant 0 : index
      %18 = vector.load %arg5[%c0_15, %c0_16] : memref<882x128xf32, #tpu.memory_space<vmem>>, vector<882x128xf32>
      tpu.vector_store %arg5[%c0_15, %c0_16], %17 {strides = array<i32>} : memref<882x128xf32, #tpu.memory_space<vmem>>, vector<882x128xf32>,
    } else {
    }
    return
  }
  func.func @transform_0(%arg0: i32, %arg1: i32) -> (i32, i32) {
    %c0_i32 = arith.constant 0 : i32
    %c0_i32_0 = arith.constant 0 : i32
    return %c0_i32, %arg1 : i32, i32
  }
  func.func @transform_1(%arg0: i32, %arg1: i32) -> (i32, i32) {
    %c0_i32 = arith.constant 0 : i32
    return %arg1, %arg0 : i32, i32
  }
  func.func @transform_2(%arg0: i32, %arg1: i32) -> (i32, i32) {
    %c0_i32 = arith.constant 0 : i32
    %c0_i32_0 = arith.constant 0 : i32
    return %c0_i32, %arg0 : i32, i32
  }
  func.func @transform_3(%arg0: i32, %arg1: i32) -> (i32, i32) {
    %c0_i32 = arith.constant 0 : i32
    %c0_i32_0 = arith.constant 0 : i32
    return %c0_i32, %arg0 : i32, i32
  }
}

</mosaic_0001>

<llo_original>
// kernel: tpu_custom_call.1
$region0: #{tpu_custom_call.1}
  #allocation0 [shape = 'u32[]', space=smem, size = 0x4, offset = 0x4, fixed_abs, tag = 'smem constant byte address 0x4 - core index']
  #allocation1 [shape = 'u32[72,128]{1,0:T(1,128)}', space=vmem, size = 0x9000, scoped, tag = 'internal scratch']
  #allocation2 [shape = 'f32[882,128]{1,0:T(8,128)}', space=vmem, size = 0x6f000, scoped, tag = 'scratch operand']
  %s0 = inlined_call_operand.hbm [shape: f32[882,256], index: 0, kind: input, shape index: {}]
  %s1 = inlined_call_operand.hbm [shape: f32[256,128], index: 1, kind: input, shape index: {}]
  %s2 = inlined_call_operand.vmem [shape: f32[1,128], index: 2, kind: input, shape index: {}]
  %s3 = inlined_call_operand.hbm [shape: f32[882,128], index: 3, kind: output, shape index: {}]
  %s4 = sld [smem:[#allocation0]]
  $region38: #{tpu_custom_call.1} parent=0
    _
  %s6 = ssub.s32 1, %s4
  %s7 = scalar_select 0, %s6, %s4
  $region1: #{tpu_custom_call.1} parent=0
    #allocation3 [shape = 'u8[909312]{0}', space=vmem, size = 0xde000, scoped, tag = 'input window, operand 0, single buffered']
    #allocation4 [shape = 's32[1]{0}', space=sflag, size = 0x4, scoped, tag = 'scoped memory for tpu_custom_call.1']
    #allocation5 [shape = 's32[1]{0}', space=sflag, size = 0x4, scoped, tag = 'scoped memory for tpu_custom_call.1']
    #allocation6 [shape = 'u8[131072]{0}', space=vmem, size = 0x20000, scoped, tag = 'input window, operand 1, single buffered']
    #allocation7 [shape = 's32[1]{0}', space=sflag, size = 0x4, scoped, tag = 'scoped memory for tpu_custom_call.1']
    #allocation8 [shape = 'u8[454656]{0}', space=vmem, size = 0x6f000, scoped, tag = 'output window, operand 0, single buffered']
    %8 = vsyncpa [#allocation4], 0
    %9 = vsyncpa [#allocation7], 0
    %10 = vsyncpa [#allocation5], 0
    // Predicated region
    $region2: #{tpu_custom_call.1} parent=1 // pred_check
      _
    $region3: #{tpu_custom_call.1} parent=1 // pred_check_branch
      %12 = sbr.rel (0) target = $region5
    $region4: #{tpu_custom_call.1} parent=1 // pred_region
      %14 = vsyncadd [#allocation4], 0
      %s15 = sshll.u32 %s0, 4
      %s16 = int_to_ptr.hbm [resolvable:$true] %s15
      %s17 = sshll.u32 [#allocation3], 4
      %s18 = int_to_ptr.vmem [resolvable:$true] %s17
      %23 = dma.hbm_to_vmem [thread:$0]  %s16, 28416, %s18, [#allocation4], 256, 256, 16
    $region5: #{tpu_custom_call.1} parent=1 // pred_fallthru
      _
    // Predicated region
    $region6: #{tpu_custom_call.1} parent=1 // pred_check
      _
    $region7: #{tpu_custom_call.1} parent=1 // pred_check_branch
      %25 = sbr.rel (0) target = $region9
    $region8: #{tpu_custom_call.1} parent=1 // pred_region
      %27 = vsyncadd [#allocation7], 0
      %s28 = sshll.u32 %s1, 4
      %s29 = int_to_ptr.hbm [resolvable:$true] %s28
      %s30 = sshll.u32 [#allocation6], 4
      %s31 = int_to_ptr.vmem [resolvable:$true] %s30
      %36 = dma.hbm_to_vmem [thread:$0]  %s29, 4096, %s31, [#allocation7], 128, 128, 8
    $region9: #{tpu_custom_call.1} parent=1 // pred_fallthru
      _
    // Predicated region
    $region10: #{tpu_custom_call.1} parent=1 // pred_check
      _
    $region11: #{tpu_custom_call.1} parent=1 // pred_check_branch
      %38 = sbr.rel (0) target = $region13
    $region12: #{tpu_custom_call.1} parent=1 // pred_region
      _
    $region13: #{tpu_custom_call.1} parent=1 // pred_fallthru
      _
    // Predicated region
    $region14: #{tpu_custom_call.1} parent=1 // pred_check
      _
    $region15: #{tpu_custom_call.1} parent=1 // pred_check_branch
      %40 = sbr.rel (0) target = $region17
    $region16: #{tpu_custom_call.1} parent=1 // pred_region
      %42 = dma.done [#allocation4], 28416
    $region17: #{tpu_custom_call.1} parent=1 // pred_fallthru
      _
    // Predicated region
    $region18: #{tpu_custom_call.1} parent=1 // pred_check
      _
    $region19: #{tpu_custom_call.1} parent=1 // pred_check_branch
      %44 = sbr.rel (0) target = $region21
    $region20: #{tpu_custom_call.1} parent=1 // pred_region
      %46 = dma.done [#allocation7], 4096
    $region21: #{tpu_custom_call.1} parent=1 // pred_fallthru
      _
    %p47 = scmp.eq.s32.totalorder 0, 0
    // Predicated region
    $region22: #{tpu_custom_call.1} parent=1 // pred_check
      %p48 = pneg %p47
    $region23: #{tpu_custom_call.1} parent=1 // pred_check_branch
      %50 = sbr.rel (%p48) target = $region25
    $region24: #{tpu_custom_call.1} parent=1 // pred_region
      %51 = vst [vmem:[#allocation2] sm:$0xff] 0.0
      %52 = vst [vmem:[#allocation2 + $0x8] sm:$0xff] 0.0
      %53 = vst [vmem:[#allocation2 + $0x10] sm:$0xff] 0.0
      %54 = vst [vmem:[#allocation2 + $0x18] sm:$0xff] 0.0
      %55 = vst [vmem:[#allocation2 + $0x20] sm:$0xff] 0.0
      %56 = vst [vmem:[#allocation2 + $0x28] sm:$0xff] 0.0
      %57 = vst [vmem:[#allocation2 + $0x30] sm:$0xff] 0.0
      %58 = vst [vmem:[#allocation2 + $0x38] sm:$0xff] 0.0
      %59 = vst [vmem:[#allocation2 + $0x40] sm:$0xff] 0.0
      %60 = vst [vmem:[#allocation2 + $0x48] sm:$0xff] 0.0
      %61 = vst [vmem:[#allocation2 + $0x50] sm:$0xff] 0.0
      %62 = vst [vmem:[#allocation2 + $0x58] sm:$0xff] 0.0
      %63 = vst [vmem:[#allocation2 + $0x60] sm:$0xff] 0.0
      %64 = vst [vmem:[#allocation2 + $0x68] sm:$0xff] 0.0
      %65 = vst [vmem:[#allocation2 + $0x70] sm:$0xff] 0.0
      %66 = vst [vmem:[#allocation2 + $0x78] sm:$0xff] 0.0
      %67 = vst [vmem:[#allocation2 + $0x80] sm:$0xff] 0.0
      %68 = vst [vmem:[#allocation2 + $0x88] sm:$0xff] 0.0
      %69 = vst [vmem:[#allocation2 + $0x90] sm:$0xff] 0.0
      %70 = vst [vmem:[#allocation2 + $0x98] sm:$0xff] 0.0
      %71 = vst [vmem:[#allocation2 + $0xa0] sm:$0xff] 0.0
      %72 = vst [vmem:[#allocation2 + $0xa8] sm:$0xff] 0.0
      %73 = vst [vmem:[#allocation2 + $0xb0] sm:$0xff] 0.0
      %74 = vst [vmem:[#allocation2 + $0xb8] sm:$0xff] 0.0
      %75 = vst [vmem:[#allocation2 + $0xc0] sm:$0xff] 0.0
      %76 = vst [vmem:[#allocation2 + $0xc8] sm:$0xff] 0.0
      %77 = vst [vmem:[#allocation2 + $0xd0] sm:$0xff] 0.0
      %78 = vst [vmem:[#allocation2 + $0xd8] sm:$0xff] 0.0
      %79 = vst [vmem:[#allocation2 + $0xe0] sm:$0xff] 0.0
      %80 = vst [vmem:[#allocation2 + $0xe8] sm:$0xff] 0.0
      %81 = vst [vmem:[#allocation2 + $0xf0] sm:$0xff] 0.0
      %82 = vst [vmem:[#allocation2 + $0xf8] sm:$0xff] 0.0
      %83 = vst [vmem:[#allocation2 + $0x100] sm:$0xff] 0.0
      %84 = vst [vmem:[#allocation2 + $0x108] sm:$0xff] 0.0
      %85 = vst [vmem:[#allocation2 + $0x110] sm:$0xff] 0.0
      %86 = vst [vmem:[#allocation2 + $0x118] sm:$0xff] 0.0
      %87 = vst [vmem:[#allocation2 + $0x120] sm:$0xff] 0.0
      %88 = vst [vmem:[#allocation2 + $0x128] sm:$0xff] 0.0
      %89 = vst [vmem:[#allocation2 + $0x130] sm:$0xff] 0.0
      %90 = vst [vmem:[#allocation2 + $0x138] sm:$0xff] 0.0
      %91 = vst [vmem:[#allocation2 + $0x140] sm:$0xff] 0.0
      %92 = vst [vmem:[#allocation2 + $0x148] sm:$0xff] 0.0
      %93 = vst [vmem:[#allocation2 + $0x150] sm:$0xff] 0.0
      %94 = vst [vmem:[#allocation2 + $0x158] sm:$0xff] 0.0
      %95 = vst [vmem:[#allocation2 + $0x160] sm:$0xff] 0.0
      %96 = vst [vmem:[#allocation2 + $0x168] sm:$0xff] 0.0
      %97 = vst [vmem:[#allocation2 + $0x170] sm:$0xff] 0.0
      %98 = vst [vmem:[#allocation2 + $0x178] sm:$0xff] 0.0
      %99 = vst [vmem:[#allocation2 + $0x180] sm:$0xff] 0.0
      %100 = vst [vmem:[#allocation2 + $0x188] sm:$0xff] 0.0
      %101 = vst [vmem:[#allocation2 + $0x190] sm:$0xff] 0.0
      %102 = vst [vmem:[#allocation2 + $0x198] sm:$0xff] 0.0
      %103 = vst [vmem:[#allocation2 + $0x1a0] sm:$0xff] 0.0
      %104 = vst [vmem:[#allocation2 + $0x1a8] sm:$0xff] 0.0
      %105 = vst [vmem:[#allocation2 + $0x1b0] sm:$0xff] 0.0
      %106 = vst [vmem:[#allocation2 + $0x1b8] sm:$0xff] 0.0
      %107 = vst [vmem:[#allocation2 + $0x1c0] sm:$0xff] 0.0
      %108 = vst [vmem:[#allocation2 + $0x1c8] sm:$0xff] 0.0
      %109 = vst [vmem:[#allocation2 + $0x1d0] sm:$0xff] 0.0
      %110 = vst [vmem:[#allocation2 + $0x1d8] sm:$0xff] 0.0
      %111 = vst [vmem:[#allocation2 + $0x1e0] sm:$0xff] 0.0
      %112 = vst [vmem:[#allocation2 + $0x1e8] sm:$0xff] 0.0
      %113 = vst [vmem:[#allocation2 + $0x1f0] sm:$0xff] 0.0
      %114 = vst [vmem:[#allocation2 + $0x1f8] sm:$0xff] 0.0
      %115 = vst [vmem:[#allocation2 + $0x200] sm:$0xff] 0.0
      %116 = vst [vmem:[#allocation2 + $0x208] sm:$0xff] 0.0
      %117 = vst [vmem:[#allocation2 + $0x210] sm:$0xff] 0.0
      %118 = vst [vmem:[#allocation2 + $0x218] sm:$0xff] 0.0
      %119 = vst [vmem:[#allocation2 + $0x220] sm:$0xff] 0.0
      %120 = vst [vmem:[#allocation2 + $0x228] sm:$0xff] 0.0
      %121 = vst [vmem:[#allocation2 + $0x230] sm:$0xff] 0.0
      %122 = vst [vmem:[#allocation2 + $0x238] sm:$0xff] 0.0
      %123 = vst [vmem:[#allocation2 + $0x240] sm:$0xff] 0.0
      %124 = vst [vmem:[#allocation2 + $0x248] sm:$0xff] 0.0
      %125 = vst [vmem:[#allocation2 + $0x250] sm:$0xff] 0.0
      %126 = vst [vmem:[#allocation2 + $0x258] sm:$0xff] 0.0
      %127 = vst [vmem:[#allocation2 + $0x260] sm:$0xff] 0.0
      %128 = vst [vmem:[#allocation2 + $0x268] sm:$0xff] 0.0
      %129 = vst [vmem:[#allocation2 + $0x270] sm:$0xff] 0.0
      %130 = vst [vmem:[#allocation2 + $0x278] sm:$0xff] 0.0
      %131 = vst [vmem:[#allocation2 + $0x280] sm:$0xff] 0.0
      %132 = vst [vmem:[#allocation2 + $0x288] sm:$0xff] 0.0
      %133 = vst [vmem:[#allocation2 + $0x290] sm:$0xff] 0.0
      %134 = vst [vmem:[#allocation2 + $0x298] sm:$0xff] 0.0
      %135 = vst [vmem:[#allocation2 + $0x2a0] sm:$0xff] 0.0
      %136 = vst [vmem:[#allocation2 + $0x2a8] sm:$0xff] 0.0
      %137 = vst [vmem:[#allocation2 + $0x2b0] sm:$0xff] 0.0
      %138 = vst [vmem:[#allocation2 + $0x2b8] sm:$0xff] 0.0
      %139 = vst [vmem:[#allocation2 + $0x2c0] sm:$0xff] 0.0
      %140 = vst [vmem:[#allocation2 + $0x2c8] sm:$0xff] 0.0
      %141 = vst [vmem:[#allocation2 + $0x2d0] sm:$0xff] 0.0
      %142 = vst [vmem:[#allocation2 + $0x2d8] sm:$0xff] 0.0
      %143 = vst [vmem:[#allocation2 + $0x2e0] sm:$0xff] 0.0
      %144 = vst [vmem:[#allocation2 + $0x2e8] sm:$0xff] 0.0
      %145 = vst [vmem:[#allocation2 + $0x2f0] sm:$0xff] 0.0
      %146 = vst [vmem:[#allocation2 + $0x2f8] sm:$0xff] 0.0
      %147 = vst [vmem:[#allocation2 + $0x300] sm:$0xff] 0.0
      %148 = vst [vmem:[#allocation2 + $0x308] sm:$0xff] 0.0
      %149 = vst [vmem:[#allocation2 + $0x310] sm:$0xff] 0.0
      %150 = vst [vmem:[#allocation2 + $0x318] sm:$0xff] 0.0
      %151 = vst [vmem:[#allocation2 + $0x320] sm:$0xff] 0.0
      %152 = vst [vmem:[#allocation2 + $0x328] sm:$0xff] 0.0
      %153 = vst [vmem:[#allocation2 + $0x330] sm:$0xff] 0.0
      %154 = vst [vmem:[#allocation2 + $0x338] sm:$0xff] 0.0
      %155 = vst [vmem:[#allocation2 + $0x340] sm:$0xff] 0.0
      %156 = vst [vmem:[#allocation2 + $0x348] sm:$0xff] 0.0
      %157 = vst [vmem:[#allocation2 + $0x350] sm:$0xff] 0.0
      %158 = vst [vmem:[#allocation2 + $0x358] sm:$0xff] 0.0
      %159 = vst [vmem:[#allocation2 + $0x360] sm:$0xff] 0.0
      %160 = vst [vmem:[#allocation2 + $0x368] sm:$0xff] 0.0
      %161 = vst [vmem:[#allocation2 + $0x370] sm:$0x3] 0.0
    $region25: #{tpu_custom_call.1} parent=1 // pred_fallthru
      _
    %v162 = vld [vmem:[#allocation2] sm:$0xff]
    %v163 = vld [vmem:[#allocation2 + $0x8] sm:$0xff]
    %v164 = vld [vmem:[#allocation2 + $0x10] sm:$0xff]
    %v165 = vld [vmem:[#allocation2 + $0x18] sm:$0xff]
    %v166 = vld [vmem:[#allocation2 + $0x20] sm:$0xff]
    %v167 = vld [vmem:[#allocation2 + $0x28] sm:$0xff]
    %v168 = vld [vmem:[#allocation2 + $0x30] sm:$0xff]
    %v169 = vld [vmem:[#allocation2 + $0x38] sm:$0xff]
    %v170 = vld [vmem:[#allocation2 + $0x40] sm:$0xff]
    %v171 = vld [vmem:[#allocation2 + $0x48] sm:$0xff]
    %v172 = vld [vmem:[#allocation2 + $0x50] sm:$0xff]
    %v173 = vld [vmem:[#allocation2 + $0x58] sm:$0xff]
    %v174 = vld [vmem:[#allocation2 + $0x60] sm:$0xff]
    %v175 = vld [vmem:[#allocation2 + $0x68] sm:$0xff]
    %v176 = vld [vmem:[#allocation2 + $0x70] sm:$0xff]
    %v177 = vld [vmem:[#allocation2 + $0x78] sm:$0xff]
    %v178 = vld [vmem:[#allocation2 + $0x80] sm:$0xff]
    %v179 = vld [vmem:[#allocation2 + $0x88] sm:$0xff]
    %v180 = vld [vmem:[#allocation2 + $0x90] sm:$0xff]
    %v181 = vld [vmem:[#allocation2 + $0x98] sm:$0xff]
    %v182 = vld [vmem:[#allocation2 + $0xa0] sm:$0xff]
    %v183 = vld [vmem:[#allocation2 + $0xa8] sm:$0xff]
    %v184 = vld [vmem:[#allocation2 + $0xb0] sm:$0xff]
    %v185 = vld [vmem:[#allocation2 + $0xb8] sm:$0xff]
    %v186 = vld [vmem:[#allocation2 + $0xc0] sm:$0xff]
    %v187 = vld [vmem:[#allocation2 + $0xc8] sm:$0xff]
    %v188 = vld [vmem:[#allocation2 + $0xd0] sm:$0xff]
    %v189 = vld [vmem:[#allocation2 + $0xd8] sm:$0xff]
    %v190 = vld [vmem:[#allocation2 + $0xe0] sm:$0xff]
    %v191 = vld [vmem:[#allocation2 + $0xe8] sm:$0xff]
    %v192 = vld [vmem:[#allocation2 + $0xf0] sm:$0xff]
    %v193 = vld [vmem:[#allocation2 + $0xf8] sm:$0xff]
    %v194 = vld [vmem:[#allocation2 + $0x100] sm:$0xff]
    %v195 = vld [vmem:[#allocation2 + $0x108] sm:$0xff]
    %v196 = vld [vmem:[#allocation2 + $0x110] sm:$0xff]
    %v197 = vld [vmem:[#allocation2 + $0x118] sm:$0xff]
    %v198 = vld [vmem:[#allocation2 + $0x120] sm:$0xff]
    %v199 = vld [vmem:[#allocation2 + $0x128] sm:$0xff]
    %v200 = vld [vmem:[#allocation2 + $0x130] sm:$0xff]
    %v201 = vld [vmem:[#allocation2 + $0x138] sm:$0xff]
    %v202 = vld [vmem:[#allocation2 + $0x140] sm:$0xff]
    %v203 = vld [vmem:[#allocation2 + $0x148] sm:$0xff]
    %v204 = vld [vmem:[#allocation2 + $0x150] sm:$0xff]
    %v205 = vld [vmem:[#allocation2 + $0x158] sm:$0xff]
    %v206 = vld [vmem:[#allocation2 + $0x160] sm:$0xff]
    %v207 = vld [vmem:[#allocation2 + $0x168] sm:$0xff]
    %v208 = vld [vmem:[#allocation2 + $0x170] sm:$0xff]
    %v209 = vld [vmem:[#allocation2 + $0x178] sm:$0xff]
    %v210 = vld [vmem:[#allocation2 + $0x180] sm:$0xff]
    %v211 = vld [vmem:[#allocation2 + $0x188] sm:$0xff]
    %v212 = vld [vmem:[#allocation2 + $0x190] sm:$0xff]
    %v213 = vld [vmem:[#allocation2 + $0x198] sm:$0xff]
    %v214 = vld [vmem:[#allocation2 + $0x1a0] sm:$0xff]
    %v215 = vld [vmem:[#allocation2 + $0x1a8] sm:$0xff]
    %v216 = vld [vmem:[#allocation2 + $0x1b0] sm:$0xff]
    %v217 = vld [vmem:[#allocation2 + $0x1b8] sm:$0xff]
    %v218 = vld [vmem:[#allocation2 + $0x1c0] sm:$0xff]
    %v219 = vld [vmem:[#allocation2 + $0x1c8] sm:$0xff]
    %v220 = vld [vmem:[#allocation2 + $0x1d0] sm:$0xff]
    %v221 = vld [vmem:[#allocation2 + $0x1d8] sm:$0xff]
    %v222 = vld [vmem:[#allocation2 + $0x1e0] sm:$0xff]
    %v223 = vld [vmem:[#allocation2 + $0x1e8] sm:$0xff]
    %v224 = vld [vmem:[#allocation2 + $0x1f0] sm:$0xff]
    %v225 = vld [vmem:[#allocation2 + $0x1f8] sm:$0xff]
    %v226 = vld [vmem:[#allocation2 + $0x200] sm:$0xff]
    %v227 = vld [vmem:[#allocation2 + $0x208] sm:$0xff]
    %v228 = vld [vmem:[#allocation2 + $0x210] sm:$0xff]
    %v229 = vld [vmem:[#allocation2 + $0x218] sm:$0xff]
    %v230 = vld [vmem:[#allocation2 + $0x220] sm:$0xff]
    %v231 = vld [vmem:[#allocation2 + $0x228] sm:$0xff]
    %v232 = vld [vmem:[#allocation2 + $0x230] sm:$0xff]
    %v233 = vld [vmem:[#allocation2 + $0x238] sm:$0xff]
    %v234 = vld [vmem:[#allocation2 + $0x240] sm:$0xff]
    %v235 = vld [vmem:[#allocation2 + $0x248] sm:$0xff]
    %v236 = vld [vmem:[#allocation2 + $0x250] sm:$0xff]
    %v237 = vld [vmem:[#allocation2 + $0x258] sm:$0xff]
    %v238 = vld [vmem:[#allocation2 + $0x260] sm:$0xff]
    %v239 = vld [vmem:[#allocation2 + $0x268] sm:$0xff]
    %v240 = vld [vmem:[#allocation2 + $0x270] sm:$0xff]
    %v241 = vld [vmem:[#allocation2 + $0x278] sm:$0xff]
    %v242 = vld [vmem:[#allocation2 + $0x280] sm:$0xff]
    %v243 = vld [vmem:[#allocation2 + $0x288] sm:$0xff]
    %v244 = vld [vmem:[#allocation2 + $0x290] sm:$0xff]
    %v245 = vld [vmem:[#allocation2 + $0x298] sm:$0xff]
    %v246 = vld [vmem:[#allocation2 + $0x2a0] sm:$0xff]
    %v247 = vld [vmem:[#allocation2 + $0x2a8] sm:$0xff]
    %v248 = vld [vmem:[#allocation2 + $0x2b0] sm:$0xff]
    %v249 = vld [vmem:[#allocation2 + $0x2b8] sm:$0xff]
    %v250 = vld [vmem:[#allocation2 + $0x2c0] sm:$0xff]
    %v251 = vld [vmem:[#allocation2 + $0x2c8] sm:$0xff]
    %v252 = vld [vmem:[#allocation2 + $0x2d0] sm:$0xff]
    %v253 = vld [vmem:[#allocation2 + $0x2d8] sm:$0xff]
    %v254 = vld [vmem:[#allocation2 + $0x2e0] sm:$0xff]
    %v255 = vld [vmem:[#allocation2 + $0x2e8] sm:$0xff]
    %v256 = vld [vmem:[#allocation2 + $0x2f0] sm:$0xff]
    %v257 = vld [vmem:[#allocation2 + $0x2f8] sm:$0xff]
    %v258 = vld [vmem:[#allocation2 + $0x300] sm:$0xff]
    %v259 = vld [vmem:[#allocation2 + $0x308] sm:$0xff]
    %v260 = vld [vmem:[#allocation2 + $0x310] sm:$0xff]
    %v261 = vld [vmem:[#allocation2 + $0x318] sm:$0xff]
    %v262 = vld [vmem:[#allocation2 + $0x320] sm:$0xff]
    %v263 = vld [vmem:[#allocation2 + $0x328] sm:$0xff]
    %v264 = vld [vmem:[#allocation2 + $0x330] sm:$0xff]
    %v265 = vld [vmem:[#allocation2 + $0x338] sm:$0xff]
    %v266 = vld [vmem:[#allocation2 + $0x340] sm:$0xff]
    %v267 = vld [vmem:[#allocation2 + $0x348] sm:$0xff]
    %v268 = vld [vmem:[#allocation2 + $0x350] sm:$0xff]
    %v269 = vld [vmem:[#allocation2 + $0x358] sm:$0xff]
    %v270 = vld [vmem:[#allocation2 + $0x360] sm:$0xff]
    %v271 = vld [vmem:[#allocation2 + $0x368] sm:$0xff]
    %v272 = vld [vmem:[#allocation2 + $0x370] sm:$0x3]
    %v273 = vld [vmem:[#allocation3] sm:$0xff]
    %v274 = vld [vmem:[#allocation3 + $0x8] sm:$0xff]
    %v275 = vld [vmem:[#allocation3 + $0x10] sm:$0xff]
    %v276 = vld [vmem:[#allocation3 + $0x18] sm:$0xff]
    %v277 = vld [vmem:[#allocation3 + $0x20] sm:$0xff]
    %v278 = vld [vmem:[#allocation3 + $0x28] sm:$0xff]
    %v279 = vld [vmem:[#allocation3 + $0x30] sm:$0xff]
    %v280 = vld [vmem:[#allocation3 + $0x38] sm:$0xff]
    %v281 = vld [vmem:[#allocation3 + $0x40] sm:$0xff]
    %v282 = vld [vmem:[#allocation3 + $0x48] sm:$0xff]
    %v283 = vld [vmem:[#allocation3 + $0x50] sm:$0xff]
    %v284 = vld [vmem:[#allocation3 + $0x58] sm:$0xff]
    %v285 = vld [vmem:[#allocation3 + $0x60] sm:$0xff]
    %v286 = vld [vmem:[#allocation3 + $0x68] sm:$0xff]
    %v287 = vld [vmem:[#allocation3 + $0x70] sm:$0xff]
    %v288 = vld [vmem:[#allocation3 + $0x78] sm:$0xff]
    %v289 = vld [vmem:[#allocation3 + $0x80] sm:$0xff]
    %v290 = vld [vmem:[#allocation3 + $0x88] sm:$0xff]
    %v291 = vld [vmem:[#allocation3 + $0x90] sm:$0xff]
    %v292 = vld [vmem:[#allocation3 + $0x98] sm:$0xff]
    %v293 = vld [vmem:[#allocation3 + $0xa0] sm:$0xff]
    %v294 = vld [vmem:[#allocation3 + $0xa8] sm:$0xff]
    %v295 = vld [vmem:[#allocation3 + $0xb0] sm:$0xff]
    %v296 = vld [vmem:[#allocation3 + $0xb8] sm:$0xff]
    %v297 = vld [vmem:[#allocation3 + $0xc0] sm:$0xff]
    %v298 = vld [vmem:[#allocation3 + $0xc8] sm:$0xff]
    %v299 = vld [vmem:[#allocation3 + $0xd0] sm:$0xff]
    %v300 = vld [vmem:[#allocation3 + $0xd8] sm:$0xff]
    %v301 = vld [vmem:[#allocation3 + $0xe0] sm:$0xff]
    %v302 = vld [vmem:[#allocation3 + $0xe8] sm:$0xff]
    %v303 = vld [vmem:[#allocation3 + $0xf0] sm:$0xff]
    %v304 = vld [vmem:[#allocation3 + $0xf8] sm:$0xff]
    %v305 = vld [vmem:[#allocation3 + $0x100] sm:$0xff]
    %v306 = vld [vmem:[#allocation3 + $0x108] sm:$0xff]
    %v307 = vld [vmem:[#allocation3 + $0x110] sm:$0xff]
    %v308 = vld [vmem:[#allocation3 + $0x118] sm:$0xff]
    %v309 = vld [vmem:[#allocation3 + $0x120] sm:$0xff]
    %v310 = vld [vmem:[#allocation3 + $0x128] sm:$0xff]
    %v311 = vld [vmem:[#allocation3 + $0x130] sm:$0xff]
    %v312 = vld [vmem:[#allocation3 + $0x138] sm:$0xff]
    %v313 = vld [vmem:[#allocation3 + $0x140] sm:$0xff]
    %v314 = vld [vmem:[#allocation3 + $0x148] sm:$0xff]
    %v315 = vld [vmem:[#allocation3 + $0x150] sm:$0xff]
    %v316 = vld [vmem:[#allocation3 + $0x158] sm:$0xff]
    %v317 = vld [vmem:[#allocation3 + $0x160] sm:$0xff]
    %v318 = vld [vmem:[#allocation3 + $0x168] sm:$0xff]
    %v319 = vld [vmem:[#allocation3 + $0x170] sm:$0xff]
    %v320 = vld [vmem:[#allocation3 + $0x178] sm:$0xff]
    %v321 = vld [vmem:[#allocation3 + $0x180] sm:$0xff]
    %v322 = vld [vmem:[#allocation3 + $0x188] sm:$0xff]
    %v323 = vld [vmem:[#allocation3 + $0x190] sm:$0xff]
    %v324 = vld [vmem:[#allocation3 + $0x198] sm:$0xff]
    %v325 = vld [vmem:[#allocation3 + $0x1a0] sm:$0xff]
    %v326 = vld [vmem:[#allocation3 + $0x1a8] sm:$0xff]
    %v327 = vld [vmem:[#allocation3 + $0x1b0] sm:$0xff]
    %v328 = vld [vmem:[#allocation3 + $0x1b8] sm:$0xff]
    %v329 = vld [vmem:[#allocation3 + $0x1c0] sm:$0xff]
    %v330 = vld [vmem:[#allocation3 + $0x1c8] sm:$0xff]
    %v331 = vld [vmem:[#allocation3 + $0x1d0] sm:$0xff]
    %v332 = vld [vmem:[#allocation3 + $0x1d8] sm:$0xff]
    %v333 = vld [vmem:[#allocation3 + $0x1e0] sm:$0xff]
    %v334 = vld [vmem:[#allocation3 + $0x1e8] sm:$0xff]
    %v335 = vld [vmem:[#allocation3 + $0x1f0] sm:$0xff]
    %v336 = vld [vmem:[#allocation3 + $0x1f8] sm:$0xff]
    %v337 = vld [vmem:[#allocation3 + $0x200] sm:$0xff]
    %v338 = vld [vmem:[#allocation3 + $0x208] sm:$0xff]
    %v339 = vld [vmem:[#allocation3 + $0x210] sm:$0xff]
    %v340 = vld [vmem:[#allocation3 + $0x218] sm:$0xff]
    %v341 = vld [vmem:[#allocation3 + $0x220] sm:$0xff]
    %v342 = vld [vmem:[#allocation3 + $0x228] sm:$0xff]
    %v343 = vld [vmem:[#allocation3 + $0x230] sm:$0xff]
    %v344 = vld [vmem:[#allocation3 + $0x238] sm:$0xff]
    %v345 = vld [vmem:[#allocation3 + $0x240] sm:$0xff]
    %v346 = vld [vmem:[#allocation3 + $0x248] sm:$0xff]
    %v347 = vld [vmem:[#allocation3 + $0x250] sm:$0xff]
    %v348 = vld [vmem:[#allocation3 + $0x258] sm:$0xff]
    %v349 = vld [vmem:[#allocation3 + $0x260] sm:$0xff]
    %v350 = vld [vmem:[#allocation3 + $0x268] sm:$0xff]
    %v351 = vld [vmem:[#allocation3 + $0x270] sm:$0xff]
    %v352 = vld [vmem:[#allocation3 + $0x278] sm:$0xff]
    %v353 = vld [vmem:[#allocation3 + $0x280] sm:$0xff]
    %v354 = vld [vmem:[#allocation3 + $0x288] sm:$0xff]
    %v355 = vld [vmem:[#allocation3 + $0x290] sm:$0xff]
    %v356 = vld [vmem:[#allocation3 + $0x298] sm:$0xff]
    %v357 = vld [vmem:[#allocation3 + $0x2a0] sm:$0xff]
    %v358 = vld [vmem:[#allocation3 + $0x2a8] sm:$0xff]
    %v359 = vld [vmem:[#allocation3 + $0x2b0] sm:$0xff]
    %v360 = vld [vmem:[#allocation3 + $0x2b8] sm:$0xff]
    %v361 = vld [vmem:[#allocation3 + $0x2c0] sm:$0xff]
    %v362 = vld [vmem:[#allocation3 + $0x2c8] sm:$0xff]
    %v363 = vld [vmem:[#allocation3 + $0x2d0] sm:$0xff]
    %v364 = vld [vmem:[#allocation3 + $0x2d8] sm:$0xff]
    %v365 = vld [vmem:[#allocation3 + $0x2e0] sm:$0xff]
    %v366 = vld [vmem:[#allocation3 + $0x2e8] sm:$0xff]
    %v367 = vld [vmem:[#allocation3 + $0x2f0] sm:$0xff]
    %v368 = vld [vmem:[#allocation3 + $0x2f8] sm:$0xff]
    %v369 = vld [vmem:[#allocation3 + $0x300] sm:$0xff]
    %v370 = vld [vmem:[#allocation3 + $0x308] sm:$0xff]
    %v371 = vld [vmem:[#allocation3 + $0x310] sm:$0xff]
    %v372 = vld [vmem:[#allocation3 + $0x318] sm:$0xff]
    %v373 = vld [vmem:[#allocation3 + $0x320] sm:$0xff]
    %v374 = vld [vmem:[#allocation3 + $0x328] sm:$0xff]
    %v375 = vld [vmem:[#allocation3 + $0x330] sm:$0xff]
    %v376 = vld [vmem:[#allocation3 + $0x338] sm:$0xff]
    %v377 = vld [vmem:[#allocation3 + $0x340] sm:$0xff]
    %v378 = vld [vmem:[#allocation3 + $0x348] sm:$0xff]
    %v379 = vld [vmem:[#allocation3 + $0x350] sm:$0xff]
    %v380 = vld [vmem:[#allocation3 + $0x358] sm:$0xff]
    %v381 = vld [vmem:[#allocation3 + $0x360] sm:$0xff]
    %v382 = vld [vmem:[#allocation3 + $0x368] sm:$0xff]
    %v383 = vld [vmem:[#allocation3 + $0x370] sm:$0xff]
    %v384 = vld [vmem:[#allocation3 + $0x378] sm:$0xff]
    %v385 = vld [vmem:[#allocation3 + $0x380] sm:$0xff]
    %v386 = vld [vmem:[#allocation3 + $0x388] sm:$0xff]
    %v387 = vld [vmem:[#allocation3 + $0x390] sm:$0xff]
    %v388 = vld [vmem:[#allocation3 + $0x398] sm:$0xff]
    %v389 = vld [vmem:[#allocation3 + $0x3a0] sm:$0xff]
    %v390 = vld [vmem:[#allocation3 + $0x3a8] sm:$0xff]
    %v391 = vld [vmem:[#allocation3 + $0x3b0] sm:$0xff]
    %v392 = vld [vmem:[#allocation3 + $0x3b8] sm:$0xff]
    %v393 = vld [vmem:[#allocation3 + $0x3c0] sm:$0xff]
    %v394 = vld [vmem:[#allocation3 + $0x3c8] sm:$0xff]
    %v395 = vld [vmem:[#allocation3 + $0x3d0] sm:$0xff]
    %v396 = vld [vmem:[#allocation3 + $0x3d8] sm:$0xff]
    %v397 = vld [vmem:[#allocation3 + $0x3e0] sm:$0xff]
    %v398 = vld [vmem:[#allocation3 + $0x3e8] sm:$0xff]
    %v399 = vld [vmem:[#allocation3 + $0x3f0] sm:$0xff]
    %v400 = vld [vmem:[#allocation3 + $0x3f8] sm:$0xff]
    %v401 = vld [vmem:[#allocation3 + $0x400] sm:$0xff]
    %v402 = vld [vmem:[#allocation3 + $0x408] sm:$0xff]
    %v403 = vld [vmem:[#allocation3 + $0x410] sm:$0xff]
    %v404 = vld [vmem:[#allocation3 + $0x418] sm:$0xff]
    %v405 = vld [vmem:[#allocation3 + $0x420] sm:$0xff]
    %v406 = vld [vmem:[#allocation3 + $0x428] sm:$0xff]
    %v407 = vld [vmem:[#allocation3 + $0x430] sm:$0xff]
    %v408 = vld [vmem:[#allocation3 + $0x438] sm:$0xff]
    %v409 = vld [vmem:[#allocation3 + $0x440] sm:$0xff]
    %v410 = vld [vmem:[#allocation3 + $0x448] sm:$0xff]
    %v411 = vld [vmem:[#allocation3 + $0x450] sm:$0xff]
    %v412 = vld [vmem:[#allocation3 + $0x458] sm:$0xff]
    %v413 = vld [vmem:[#allocation3 + $0x460] sm:$0xff]
    %v414 = vld [vmem:[#allocation3 + $0x468] sm:$0xff]
    %v415 = vld [vmem:[#allocation3 + $0x470] sm:$0xff]
    %v416 = vld [vmem:[#allocation3 + $0x478] sm:$0xff]
    %v417 = vld [vmem:[#allocation3 + $0x480] sm:$0xff]
    %v418 = vld [vmem:[#allocation3 + $0x488] sm:$0xff]
    %v419 = vld [vmem:[#allocation3 + $0x490] sm:$0xff]
    %v420 = vld [vmem:[#allocation3 + $0x498] sm:$0xff]
    %v421 = vld [vmem:[#allocation3 + $0x4a0] sm:$0xff]
    %v422 = vld [vmem:[#allocation3 + $0x4a8] sm:$0xff]
    %v423 = vld [vmem:[#allocation3 + $0x4b0] sm:$0xff]
    %v424 = vld [vmem:[#allocation3 + $0x4b8] sm:$0xff]
    %v425 = vld [vmem:[#allocation3 + $0x4c0] sm:$0xff]
    %v426 = vld [vmem:[#allocation3 + $0x4c8] sm:$0xff]
    %v427 = vld [vmem:[#allocation3 + $0x4d0] sm:$0xff]
    %v428 = vld [vmem:[#allocation3 + $0x4d8] sm:$0xff]
    %v429 = vld [vmem:[#allocation3 + $0x4e0] sm:$0xff]
    %v430 = vld [vmem:[#allocation3 + $0x4e8] sm:$0xff]
    %v431 = vld [vmem:[#allocation3 + $0x4f0] sm:$0xff]
    %v432 = vld [vmem:[#allocation3 + $0x4f8] sm:$0xff]
    %v433 = vld [vmem:[#allocation3 + $0x500] sm:$0xff]
    %v434 = vld [vmem:[#allocation3 + $0x508] sm:$0xff]
    %v435 = vld [vmem:[#allocation3 + $0x510] sm:$0xff]
    %v436 = vld [vmem:[#allocation3 + $0x518] sm:$0xff]
    %v437 = vld [vmem:[#allocation3 + $0x520] sm:$0xff]
    %v438 = vld [vmem:[#allocation3 + $0x528] sm:$0xff]
    %v439 = vld [vmem:[#allocation3 + $0x530] sm:$0xff]
    %v440 = vld [vmem:[#allocation3 + $0x538] sm:$0xff]
    %v441 = vld [vmem:[#allocation3 + $0x540] sm:$0xff]
    %v442 = vld [vmem:[#allocation3 + $0x548] sm:$0xff]
    %v443 = vld [vmem:[#allocation3 + $0x550] sm:$0xff]
    %v444 = vld [vmem:[#allocation3 + $0x558] sm:$0xff]
    %v445 = vld [vmem:[#allocation3 + $0x560] sm:$0xff]
    %v446 = vld [vmem:[#allocation3 + $0x568] sm:$0xff]
    %v447 = vld [vmem:[#allocation3 + $0x570] sm:$0xff]
    %v448 = vld [vmem:[#allocation3 + $0x578] sm:$0xff]
    %v449 = vld [vmem:[#allocation3 + $0x580] sm:$0xff]
    %v450 = vld [vmem:[#allocation3 + $0x588] sm:$0xff]
    %v451 = vld [vmem:[#allocation3 + $0x590] sm:$0xff]
    %v452 = vld [vmem:[#allocation3 + $0x598] sm:$0xff]
    %v453 = vld [vmem:[#allocation3 + $0x5a0] sm:$0xff]
    %v454 = vld [vmem:[#allocation3 + $0x5a8] sm:$0xff]
    %v455 = vld [vmem:[#allocation3 + $0x5b0] sm:$0xff]
    %v456 = vld [vmem:[#allocation3 + $0x5b8] sm:$0xff]
    %v457 = vld [vmem:[#allocation3 + $0x5c0] sm:$0xff]
    %v458 = vld [vmem:[#allocation3 + $0x5c8] sm:$0xff]
    %v459 = vld [vmem:[#allocation3 + $0x5d0] sm:$0xff]
    %v460 = vld [vmem:[#allocation3 + $0x5d8] sm:$0xff]
    %v461 = vld [vmem:[#allocation3 + $0x5e0] sm:$0xff]
    %v462 = vld [vmem:[#allocation3 + $0x5e8] sm:$0xff]
    %v463 = vld [vmem:[#allocation3 + $0x5f0] sm:$0xff]
    %v464 = vld [vmem:[#allocation3 + $0x5f8] sm:$0xff]
    %v465 = vld [vmem:[#allocation3 + $0x600] sm:$0xff]
    %v466 = vld [vmem:[#allocation3 + $0x608] sm:$0xff]
    %v467 = vld [vmem:[#allocation3 + $0x610] sm:$0xff]
    %v468 = vld [vmem:[#allocation3 + $0x618] sm:$0xff]
    %v469 = vld [vmem:[#allocation3 + $0x620] sm:$0xff]
    %v470 = vld [vmem:[#allocation3 + $0x628] sm:$0xff]
    %v471 = vld [vmem:[#allocation3 + $0x630] sm:$0xff]
    %v472 = vld [vmem:[#allocation3 + $0x638] sm:$0xff]
    %v473 = vld [vmem:[#allocation3 + $0x640] sm:$0xff]
    %v474 = vld [vmem:[#allocation3 + $0x648] sm:$0xff]
    %v475 = vld [vmem:[#allocation3 + $0x650] sm:$0xff]
    %v476 = vld [vmem:[#allocation3 + $0x658] sm:$0xff]
    %v477 = vld [vmem:[#allocation3 + $0x660] sm:$0xff]
    %v478 = vld [vmem:[#allocation3 + $0x668] sm:$0xff]
    %v479 = vld [vmem:[#allocation3 + $0x670] sm:$0xff]
    %v480 = vld [vmem:[#allocation3 + $0x678] sm:$0xff]
    %v481 = vld [vmem:[#allocation3 + $0x680] sm:$0xff]
    %v482 = vld [vmem:[#allocation3 + $0x688] sm:$0xff]
    %v483 = vld [vmem:[#allocation3 + $0x690] sm:$0xff]
    %v484 = vld [vmem:[#allocation3 + $0x698] sm:$0xff]
    %v485 = vld [vmem:[#allocation3 + $0x6a0] sm:$0xff]
    %v486 = vld [vmem:[#allocation3 + $0x6a8] sm:$0xff]
    %v487 = vld [vmem:[#allocation3 + $0x6b0] sm:$0xff]
    %v488 = vld [vmem:[#allocation3 + $0x6b8] sm:$0xff]
    %v489 = vld [vmem:[#allocation3 + $0x6c0] sm:$0xff]
    %v490 = vld [vmem:[#allocation3 + $0x6c8] sm:$0xff]
    %v491 = vld [vmem:[#allocation3 + $0x6d0] sm:$0xff]
    %v492 = vld [vmem:[#allocation3 + $0x6d8] sm:$0xff]
    %v493 = vld [vmem:[#allocation3 + $0x6e0] sm:$0x3]
    %v494 = vld [vmem:[#allocation3 + $0x6e8] sm:$0x3]
    %v495 = vld [vmem:[#allocation6] sm:$0xff]
    %v496 = vld [vmem:[#allocation6 + $0x8] sm:$0xff]
    %v497 = vld [vmem:[#allocation6 + $0x10] sm:$0xff]
    %v498 = vld [vmem:[#allocation6 + $0x18] sm:$0xff]
    %v499 = vld [vmem:[#allocation6 + $0x20] sm:$0xff]
    %v500 = vld [vmem:[#allocation6 + $0x28] sm:$0xff]
    %v501 = vld [vmem:[#allocation6 + $0x30] sm:$0xff]
    %v502 = vld [vmem:[#allocation6 + $0x38] sm:$0xff]
    %v503 = vld [vmem:[#allocation6 + $0x40] sm:$0xff]
    %v504 = vld [vmem:[#allocation6 + $0x48] sm:$0xff]
    %v505 = vld [vmem:[#allocation6 + $0x50] sm:$0xff]
    %v506 = vld [vmem:[#allocation6 + $0x58] sm:$0xff]
    %v507 = vld [vmem:[#allocation6 + $0x60] sm:$0xff]
    %v508 = vld [vmem:[#allocation6 + $0x68] sm:$0xff]
    %v509 = vld [vmem:[#allocation6 + $0x70] sm:$0xff]
    %v510 = vld [vmem:[#allocation6 + $0x78] sm:$0xff]
    %v511 = vld [vmem:[#allocation6 + $0x80] sm:$0xff]
    %v512 = vld [vmem:[#allocation6 + $0x88] sm:$0xff]
    %v513 = vld [vmem:[#allocation6 + $0x90] sm:$0xff]
    %v514 = vld [vmem:[#allocation6 + $0x98] sm:$0xff]
    %v515 = vld [vmem:[#allocation6 + $0xa0] sm:$0xff]
    %v516 = vld [vmem:[#allocation6 + $0xa8] sm:$0xff]
    %v517 = vld [vmem:[#allocation6 + $0xb0] sm:$0xff]
    %v518 = vld [vmem:[#allocation6 + $0xb8] sm:$0xff]
    %v519 = vld [vmem:[#allocation6 + $0xc0] sm:$0xff]
    %v520 = vld [vmem:[#allocation6 + $0xc8] sm:$0xff]
    %v521 = vld [vmem:[#allocation6 + $0xd0] sm:$0xff]
    %v522 = vld [vmem:[#allocation6 + $0xd8] sm:$0xff]
    %v523 = vld [vmem:[#allocation6 + $0xe0] sm:$0xff]
    %v524 = vld [vmem:[#allocation6 + $0xe8] sm:$0xff]
    %v525 = vld [vmem:[#allocation6 + $0xf0] sm:$0xff]
    %v526 = vld [vmem:[#allocation6 + $0xf8] sm:$0xff]
    %527 = vmatpush.msra.mxu0 %v510
    %528 = vmatpush.msra.mxu0 %v509
    %529 = vmatpush.msra.mxu0 %v508
    %530 = vmatpush.msra.mxu0 %v507
    %531 = vmatpush.msra.mxu0 %v506
    %532 = vmatpush.msra.mxu0 %v505
    %533 = vmatpush.msra.mxu0 %v504
    %534 = vmatpush.msra.mxu0 %v503
    %535 = vmatpush.msra.mxu0 %v502
    %536 = vmatpush.msra.mxu0 %v501
    %537 = vmatpush.msra.mxu0 %v500
    %538 = vmatpush.msra.mxu0 %v499
    %539 = vmatpush.msra.mxu0 %v498
    %540 = vmatpush.msra.mxu0 %v497
    %541 = vmatpush.msra.mxu0 %v496
    %542 = vmatpush.msra.mxu0 %v495
    %543 = vmatmul.f32.gmra.mxu0 %v273
    %v544 = vpop.f32.mrf.mxu0
    %v545 = vadd.f32 0.0, %v544
    %546 = vmatmul.f32.gmra.mxu0 %v275
    %v547 = vpop.f32.mrf.mxu0
    %v548 = vadd.f32 0.0, %v547
    %549 = vmatmul.f32.gmra.mxu0 %v277
    %v550 = vpop.f32.mrf.mxu0
    %v551 = vadd.f32 0.0, %v550
    %552 = vmatmul.f32.gmra.mxu0 %v279
    %v553 = vpop.f32.mrf.mxu0
    %v554 = vadd.f32 0.0, %v553
    %555 = vmatmul.f32.gmra.mxu0 %v281
    %v556 = vpop.f32.mrf.mxu0
    %v557 = vadd.f32 0.0, %v556
    %558 = vmatmul.f32.gmra.mxu0 %v283
    %v559 = vpop.f32.mrf.mxu0
    %v560 = vadd.f32 0.0, %v559
    %561 = vmatmul.f32.gmra.mxu0 %v285
    %v562 = vpop.f32.mrf.mxu0
    %v563 = vadd.f32 0.0, %v562
    %564 = vmatmul.f32.gmra.mxu0 %v287
    %v565 = vpop.f32.mrf.mxu0
    %v566 = vadd.f32 0.0, %v565
    %567 = vmatmul.f32.gmra.mxu0 %v289
    %v568 = vpop.f32.mrf.mxu0
    %v569 = vadd.f32 0.0, %v568
    %570 = vmatmul.f32.gmra.mxu0 %v291
    %v571 = vpop.f32.mrf.mxu0
    %v572 = vadd.f32 0.0, %v571
    %573 = vmatmul.f32.gmra.mxu0 %v293
    %v574 = vpop.f32.mrf.mxu0
    %v575 = vadd.f32 0.0, %v574
    %576 = vmatmul.f32.gmra.mxu0 %v295
    %v577 = vpop.f32.mrf.mxu0
    %v578 = vadd.f32 0.0, %v577
    %579 = vmatmul.f32.gmra.mxu0 %v297
    %v580 = vpop.f32.mrf.mxu0
    %v581 = vadd.f32 0.0, %v580
    %582 = vmatmul.f32.gmra.mxu0 %v299
    %v583 = vpop.f32.mrf.mxu0
    %v584 = vadd.f32 0.0, %v583
    %585 = vmatmul.f32.gmra.mxu0 %v301
    %v586 = vpop.f32.mrf.mxu0
    %v587 = vadd.f32 0.0, %v586
    %588 = vmatmul.f32.gmra.mxu0 %v303
    %v589 = vpop.f32.mrf.mxu0
    %v590 = vadd.f32 0.0, %v589
    %591 = vmatmul.f32.gmra.mxu0 %v305
    %v592 = vpop.f32.mrf.mxu0
    %v593 = vadd.f32 0.0, %v592
    %594 = vmatmul.f32.gmra.mxu0 %v307
    %v595 = vpop.f32.mrf.mxu0
    %v596 = vadd.f32 0.0, %v595
    %597 = vmatmul.f32.gmra.mxu0 %v309
    %v598 = vpop.f32.mrf.mxu0
    %v599 = vadd.f32 0.0, %v598
    %600 = vmatmul.f32.gmra.mxu0 %v311
    %v601 = vpop.f32.mrf.mxu0
    %v602 = vadd.f32 0.0, %v601
    %603 = vmatmul.f32.gmra.mxu0 %v313
    %v604 = vpop.f32.mrf.mxu0
    %v605 = vadd.f32 0.0, %v604
    %606 = vmatmul.f32.gmra.mxu0 %v315
    %v607 = vpop.f32.mrf.mxu0
    %v608 = vadd.f32 0.0, %v607
    %609 = vmatmul.f32.gmra.mxu0 %v317
    %v610 = vpop.f32.mrf.mxu0
    %v611 = vadd.f32 0.0, %v610
    %612 = vmatmul.f32.gmra.mxu0 %v319
    %v613 = vpop.f32.mrf.mxu0
    %v614 = vadd.f32 0.0, %v613
    %615 = vmatmul.f32.gmra.mxu0 %v321
    %v616 = vpop.f32.mrf.mxu0
    %v617 = vadd.f32 0.0, %v616
    %618 = vmatmul.f32.gmra.mxu0 %v323
    %v619 = vpop.f32.mrf.mxu0
    %v620 = vadd.f32 0.0, %v619
    %621 = vmatmul.f32.gmra.mxu0 %v325
    %v622 = vpop.f32.mrf.mxu0
    %v623 = vadd.f32 0.0, %v622
    %624 = vmatmul.f32.gmra.mxu0 %v327
    %v625 = vpop.f32.mrf.mxu0
    %v626 = vadd.f32 0.0, %v625
    %627 = vmatmul.f32.gmra.mxu0 %v329
    %v628 = vpop.f32.mrf.mxu0
    %v629 = vadd.f32 0.0, %v628
    %630 = vmatmul.f32.gmra.mxu0 %v331
    %v631 = vpop.f32.mrf.mxu0
    %v632 = vadd.f32 0.0, %v631
    %633 = vmatmul.f32.gmra.mxu0 %v333
    %v634 = vpop.f32.mrf.mxu0
    %v635 = vadd.f32 0.0, %v634
    %636 = vmatmul.f32.gmra.mxu0 %v335
    %v637 = vpop.f32.mrf.mxu0
    %v638 = vadd.f32 0.0, %v637
    %639 = vmatmul.f32.gmra.mxu0 %v337
    %v640 = vpop.f32.mrf.mxu0
    %v641 = vadd.f32 0.0, %v640
    %642 = vmatmul.f32.gmra.mxu0 %v339
    %v643 = vpop.f32.mrf.mxu0
    %v644 = vadd.f32 0.0, %v643
    %645 = vmatmul.f32.gmra.mxu0 %v341
    %v646 = vpop.f32.mrf.mxu0
    %v647 = vadd.f32 0.0, %v646
    %648 = vmatmul.f32.gmra.mxu0 %v343
    %v649 = vpop.f32.mrf.mxu0
    %v650 = vadd.f32 0.0, %v649
    %651 = vmatmul.f32.gmra.mxu0 %v345
    %v652 = vpop.f32.mrf.mxu0
    %v653 = vadd.f32 0.0, %v652
    %654 = vmatmul.f32.gmra.mxu0 %v347
    %v655 = vpop.f32.mrf.mxu0
    %v656 = vadd.f32 0.0, %v655
    %657 = vmatmul.f32.gmra.mxu0 %v349
    %v658 = vpop.f32.mrf.mxu0
    %v659 = vadd.f32 0.0, %v658
    %660 = vmatmul.f32.gmra.mxu0 %v351
    %v661 = vpop.f32.mrf.mxu0
    %v662 = vadd.f32 0.0, %v661
    %663 = vmatmul.f32.gmra.mxu0 %v353
    %v664 = vpop.f32.mrf.mxu0
    %v665 = vadd.f32 0.0, %v664
    %666 = vmatmul.f32.gmra.mxu0 %v355
    %v667 = vpop.f32.mrf.mxu0
    %v668 = vadd.f32 0.0, %v667
    %669 = vmatmul.f32.gmra.mxu0 %v357
    %v670 = vpop.f32.mrf.mxu0
    %v671 = vadd.f32 0.0, %v670
    %672 = vmatmul.f32.gmra.mxu0 %v359
    %v673 = vpop.f32.mrf.mxu0
    %v674 = vadd.f32 0.0, %v673
    %675 = vmatmul.f32.gmra.mxu0 %v361
    %v676 = vpop.f32.mrf.mxu0
    %v677 = vadd.f32 0.0, %v676
    %678 = vmatmul.f32.gmra.mxu0 %v363
    %v679 = vpop.f32.mrf.mxu0
    %v680 = vadd.f32 0.0, %v679
    %681 = vmatmul.f32.gmra.mxu0 %v365
    %v682 = vpop.f32.mrf.mxu0
    %v683 = vadd.f32 0.0, %v682
    %684 = vmatmul.f32.gmra.mxu0 %v367
    %v685 = vpop.f32.mrf.mxu0
    %v686 = vadd.f32 0.0, %v685
    %687 = vmatmul.f32.gmra.mxu0 %v369
    %v688 = vpop.f32.mrf.mxu0
    %v689 = vadd.f32 0.0, %v688
    %690 = vmatmul.f32.gmra.mxu0 %v371
    %v691 = vpop.f32.mrf.mxu0
    %v692 = vadd.f32 0.0, %v691
    %693 = vmatmul.f32.gmra.mxu0 %v373
    %v694 = vpop.f32.mrf.mxu0
    %v695 = vadd.f32 0.0, %v694
    %696 = vmatmul.f32.gmra.mxu0 %v375
    %v697 = vpop.f32.mrf.mxu0
    %v698 = vadd.f32 0.0, %v697
    %699 = vmatmul.f32.gmra.mxu0 %v377
    %v700 = vpop.f32.mrf.mxu0
    %v701 = vadd.f32 0.0, %v700
    %702 = vmatmul.f32.gmra.mxu0 %v379
    %v703 = vpop.f32.mrf.mxu0
    %v704 = vadd.f32 0.0, %v703
    %705 = vmatmul.f32.gmra.mxu0 %v381
    %v706 = vpop.f32.mrf.mxu0
    %v707 = vadd.f32 0.0, %v706
    %708 = vmatmul.f32.gmra.mxu0 %v383
    %v709 = vpop.f32.mrf.mxu0
    %v710 = vadd.f32 0.0, %v709
    %711 = vmatmul.f32.gmra.mxu0 %v385
    %v712 = vpop.f32.mrf.mxu0
    %v713 = vadd.f32 0.0, %v712
    %714 = vmatmul.f32.gmra.mxu0 %v387
    %v715 = vpop.f32.mrf.mxu0
    %v716 = vadd.f32 0.0, %v715
    %717 = vmatmul.f32.gmra.mxu0 %v389
    %v718 = vpop.f32.mrf.mxu0
    %v719 = vadd.f32 0.0, %v718
    %720 = vmatmul.f32.gmra.mxu0 %v391
    %v721 = vpop.f32.mrf.mxu0
    %v722 = vadd.f32 0.0, %v721
    %723 = vmatmul.f32.gmra.mxu0 %v393
    %v724 = vpop.f32.mrf.mxu0
    %v725 = vadd.f32 0.0, %v724
    %726 = vmatmul.f32.gmra.mxu0 %v395
    %v727 = vpop.f32.mrf.mxu0
    %v728 = vadd.f32 0.0, %v727
    %729 = vmatmul.f32.gmra.mxu0 %v397
    %v730 = vpop.f32.mrf.mxu0
    %v731 = vadd.f32 0.0, %v730
    %732 = vmatmul.f32.gmra.mxu0 %v399
    %v733 = vpop.f32.mrf.mxu0
    %v734 = vadd.f32 0.0, %v733
    %735 = vmatmul.f32.gmra.mxu0 %v401
    %v736 = vpop.f32.mrf.mxu0
    %v737 = vadd.f32 0.0, %v736
    %738 = vmatmul.f32.gmra.mxu0 %v403
    %v739 = vpop.f32.mrf.mxu0
    %v740 = vadd.f32 0.0, %v739
    %741 = vmatmul.f32.gmra.mxu0 %v405
    %v742 = vpop.f32.mrf.mxu0
    %v743 = vadd.f32 0.0, %v742
    %744 = vmatmul.f32.gmra.mxu0 %v407
    %v745 = vpop.f32.mrf.mxu0
    %v746 = vadd.f32 0.0, %v745
    %747 = vmatmul.f32.gmra.mxu0 %v409
    %v748 = vpop.f32.mrf.mxu0
    %v749 = vadd.f32 0.0, %v748
    %750 = vmatmul.f32.gmra.mxu0 %v411
    %v751 = vpop.f32.mrf.mxu0
    %v752 = vadd.f32 0.0, %v751
    %753 = vmatmul.f32.gmra.mxu0 %v413
    %v754 = vpop.f32.mrf.mxu0
    %v755 = vadd.f32 0.0, %v754
    %756 = vmatmul.f32.gmra.mxu0 %v415
    %v757 = vpop.f32.mrf.mxu0
    %v758 = vadd.f32 0.0, %v757
    %759 = vmatmul.f32.gmra.mxu0 %v417
    %v760 = vpop.f32.mrf.mxu0
    %v761 = vadd.f32 0.0, %v760
    %762 = vmatmul.f32.gmra.mxu0 %v419
    %v763 = vpop.f32.mrf.mxu0
    %v764 = vadd.f32 0.0, %v763
    %765 = vmatmul.f32.gmra.mxu0 %v421
    %v766 = vpop.f32.mrf.mxu0
    %v767 = vadd.f32 0.0, %v766
    %768 = vmatmul.f32.gmra.mxu0 %v423
    %v769 = vpop.f32.mrf.mxu0
    %v770 = vadd.f32 0.0, %v769
    %771 = vmatmul.f32.gmra.mxu0 %v425
    %v772 = vpop.f32.mrf.mxu0
    %v773 = vadd.f32 0.0, %v772
    %774 = vmatmul.f32.gmra.mxu0 %v427
    %v775 = vpop.f32.mrf.mxu0
    %v776 = vadd.f32 0.0, %v775
    %777 = vmatmul.f32.gmra.mxu0 %v429
    %v778 = vpop.f32.mrf.mxu0
    %v779 = vadd.f32 0.0, %v778
    %780 = vmatmul.f32.gmra.mxu0 %v431
    %v781 = vpop.f32.mrf.mxu0
    %v782 = vadd.f32 0.0, %v781
    %783 = vmatmul.f32.gmra.mxu0 %v433
    %v784 = vpop.f32.mrf.mxu0
    %v785 = vadd.f32 0.0, %v784
    %786 = vmatmul.f32.gmra.mxu0 %v435
    %v787 = vpop.f32.mrf.mxu0
    %v788 = vadd.f32 0.0, %v787
    %789 = vmatmul.f32.gmra.mxu0 %v437
    %v790 = vpop.f32.mrf.mxu0
    %v791 = vadd.f32 0.0, %v790
    %792 = vmatmul.f32.gmra.mxu0 %v439
    %v793 = vpop.f32.mrf.mxu0
    %v794 = vadd.f32 0.0, %v793
    %795 = vmatmul.f32.gmra.mxu0 %v441
    %v796 = vpop.f32.mrf.mxu0
    %v797 = vadd.f32 0.0, %v796
    %798 = vmatmul.f32.gmra.mxu0 %v443
    %v799 = vpop.f32.mrf.mxu0
    %v800 = vadd.f32 0.0, %v799
    %801 = vmatmul.f32.gmra.mxu0 %v445
    %v802 = vpop.f32.mrf.mxu0
    %v803 = vadd.f32 0.0, %v802
    %804 = vmatmul.f32.gmra.mxu0 %v447
    %v805 = vpop.f32.mrf.mxu0
    %v806 = vadd.f32 0.0, %v805
    %807 = vmatmul.f32.gmra.mxu0 %v449
    %v808 = vpop.f32.mrf.mxu0
    %v809 = vadd.f32 0.0, %v808
    %810 = vmatmul.f32.gmra.mxu0 %v451
    %v811 = vpop.f32.mrf.mxu0
    %v812 = vadd.f32 0.0, %v811
    %813 = vmatmul.f32.gmra.mxu0 %v453
    %v814 = vpop.f32.mrf.mxu0
    %v815 = vadd.f32 0.0, %v814
    %816 = vmatmul.f32.gmra.mxu0 %v455
    %v817 = vpop.f32.mrf.mxu0
    %v818 = vadd.f32 0.0, %v817
    %819 = vmatmul.f32.gmra.mxu0 %v457
    %v820 = vpop.f32.mrf.mxu0
    %v821 = vadd.f32 0.0, %v820
    %822 = vmatmul.f32.gmra.mxu0 %v459
    %v823 = vpop.f32.mrf.mxu0
    %v824 = vadd.f32 0.0, %v823
    %825 = vmatmul.f32.gmra.mxu0 %v461
    %v826 = vpop.f32.mrf.mxu0
    %v827 = vadd.f32 0.0, %v826
    %828 = vmatmul.f32.gmra.mxu0 %v463
    %v829 = vpop.f32.mrf.mxu0
    %v830 = vadd.f32 0.0, %v829
    %831 = vmatmul.f32.gmra.mxu0 %v465
    %v832 = vpop.f32.mrf.mxu0
    %v833 = vadd.f32 0.0, %v832
    %834 = vmatmul.f32.gmra.mxu0 %v467
    %v835 = vpop.f32.mrf.mxu0
    %v836 = vadd.f32 0.0, %v835
    %837 = vmatmul.f32.gmra.mxu0 %v469
    %v838 = vpop.f32.mrf.mxu0
    %v839 = vadd.f32 0.0, %v838
    %840 = vmatmul.f32.gmra.mxu0 %v471
    %v841 = vpop.f32.mrf.mxu0
    %v842 = vadd.f32 0.0, %v841
    %843 = vmatmul.f32.gmra.mxu0 %v473
    %v844 = vpop.f32.mrf.mxu0
    %v845 = vadd.f32 0.0, %v844
    %846 = vmatmul.f32.gmra.mxu0 %v475
    %v847 = vpop.f32.mrf.mxu0
    %v848 = vadd.f32 0.0, %v847
    %849 = vmatmul.f32.gmra.mxu0 %v477
    %v850 = vpop.f32.mrf.mxu0
    %v851 = vadd.f32 0.0, %v850
    %852 = vmatmul.f32.gmra.mxu0 %v479
    %v853 = vpop.f32.mrf.mxu0
    %v854 = vadd.f32 0.0, %v853
    %855 = vmatmul.f32.gmra.mxu0 %v481
    %v856 = vpop.f32.mrf.mxu0
    %v857 = vadd.f32 0.0, %v856
    %858 = vmatmul.f32.gmra.mxu0 %v483
    %v859 = vpop.f32.mrf.mxu0
    %v860 = vadd.f32 0.0, %v859
    %861 = vmatmul.f32.gmra.mxu0 %v485
    %v862 = vpop.f32.mrf.mxu0
    %v863 = vadd.f32 0.0, %v862
    %864 = vmatmul.f32.gmra.mxu0 %v487
    %v865 = vpop.f32.mrf.mxu0
    %v866 = vadd.f32 0.0, %v865
    %867 = vmatmul.f32.gmra.mxu0 %v489
    %v868 = vpop.f32.mrf.mxu0
    %v869 = vadd.f32 0.0, %v868
    %870 = vmatmul.f32.gmra.mxu0 %v491
    %v871 = vpop.f32.mrf.mxu0
    %v872 = vadd.f32 0.0, %v871
    %873 = vmatmul.f32.gmra.mxu0 %v493
    %v874 = vpop.f32.mrf.mxu0
    %v875 = vadd.f32 0.0, %v874
    %876 = vdwg.mxu0
    %877 = vmatpush.msra.mxu0 %v526
    %878 = vmatpush.msra.mxu0 %v525
    %879 = vmatpush.msra.mxu0 %v524
    %880 = vmatpush.msra.mxu0 %v523
    %881 = vmatpush.msra.mxu0 %v522
    %882 = vmatpush.msra.mxu0 %v521
    %883 = vmatpush.msra.mxu0 %v520
    %884 = vmatpush.msra.mxu0 %v519
    %885 = vmatpush.msra.mxu0 %v518
    %886 = vmatpush.msra.mxu0 %v517
    %887 = vmatpush.msra.mxu0 %v516
    %888 = vmatpush.msra.mxu0 %v515
    %889 = vmatpush.msra.mxu0 %v514
    %890 = vmatpush.msra.mxu0 %v513
    %891 = vmatpush.msra.mxu0 %v512
    %892 = vmatpush.msra.mxu0 %v511
    %893 = vmatmul.f32.gmra.mxu0 %v274
    %v894 = vpop.f32.mrf.mxu0
    %v895 = vadd.f32 %v545, %v894
    %896 = vmatmul.f32.gmra.mxu0 %v276
    %v897 = vpop.f32.mrf.mxu0
    %v898 = vadd.f32 %v548, %v897
    %899 = vmatmul.f32.gmra.mxu0 %v278
    %v900 = vpop.f32.mrf.mxu0
    %v901 = vadd.f32 %v551, %v900
    %902 = vmatmul.f32.gmra.mxu0 %v280
    %v903 = vpop.f32.mrf.mxu0
    %v904 = vadd.f32 %v554, %v903
    %905 = vmatmul.f32.gmra.mxu0 %v282
    %v906 = vpop.f32.mrf.mxu0
    %v907 = vadd.f32 %v557, %v906
    %908 = vmatmul.f32.gmra.mxu0 %v284
    %v909 = vpop.f32.mrf.mxu0
    %v910 = vadd.f32 %v560, %v909
    %911 = vmatmul.f32.gmra.mxu0 %v286
    %v912 = vpop.f32.mrf.mxu0
    %v913 = vadd.f32 %v563, %v912
    %914 = vmatmul.f32.gmra.mxu0 %v288
    %v915 = vpop.f32.mrf.mxu0
    %v916 = vadd.f32 %v566, %v915
    %917 = vmatmul.f32.gmra.mxu0 %v290
    %v918 = vpop.f32.mrf.mxu0
    %v919 = vadd.f32 %v569, %v918
    %920 = vmatmul.f32.gmra.mxu0 %v292
    %v921 = vpop.f32.mrf.mxu0
    %v922 = vadd.f32 %v572, %v921
    %923 = vmatmul.f32.gmra.mxu0 %v294
    %v924 = vpop.f32.mrf.mxu0
    %v925 = vadd.f32 %v575, %v924
    %926 = vmatmul.f32.gmra.mxu0 %v296
    %v927 = vpop.f32.mrf.mxu0
    %v928 = vadd.f32 %v578, %v927
    %929 = vmatmul.f32.gmra.mxu0 %v298
    %v930 = vpop.f32.mrf.mxu0
    %v931 = vadd.f32 %v581, %v930
    %932 = vmatmul.f32.gmra.mxu0 %v300
    %v933 = vpop.f32.mrf.mxu0
    %v934 = vadd.f32 %v584, %v933
    %935 = vmatmul.f32.gmra.mxu0 %v302
    %v936 = vpop.f32.mrf.mxu0
    %v937 = vadd.f32 %v587, %v936
    %938 = vmatmul.f32.gmra.mxu0 %v304
    %v939 = vpop.f32.mrf.mxu0
    %v940 = vadd.f32 %v590, %v939
    %941 = vmatmul.f32.gmra.mxu0 %v306
    %v942 = vpop.f32.mrf.mxu0
    %v943 = vadd.f32 %v593, %v942
    %944 = vmatmul.f32.gmra.mxu0 %v308
    %v945 = vpop.f32.mrf.mxu0
    %v946 = vadd.f32 %v596, %v945
    %947 = vmatmul.f32.gmra.mxu0 %v310
    %v948 = vpop.f32.mrf.mxu0
    %v949 = vadd.f32 %v599, %v948
    %950 = vmatmul.f32.gmra.mxu0 %v312
    %v951 = vpop.f32.mrf.mxu0
    %v952 = vadd.f32 %v602, %v951
    %953 = vmatmul.f32.gmra.mxu0 %v314
    %v954 = vpop.f32.mrf.mxu0
    %v955 = vadd.f32 %v605, %v954
    %956 = vmatmul.f32.gmra.mxu0 %v316
    %v957 = vpop.f32.mrf.mxu0
    %v958 = vadd.f32 %v608, %v957
    %959 = vmatmul.f32.gmra.mxu0 %v318
    %v960 = vpop.f32.mrf.mxu0
    %v961 = vadd.f32 %v611, %v960
    %962 = vmatmul.f32.gmra.mxu0 %v320
    %v963 = vpop.f32.mrf.mxu0
    %v964 = vadd.f32 %v614, %v963
    %965 = vmatmul.f32.gmra.mxu0 %v322
    %v966 = vpop.f32.mrf.mxu0
    %v967 = vadd.f32 %v617, %v966
    %968 = vmatmul.f32.gmra.mxu0 %v324
    %v969 = vpop.f32.mrf.mxu0
    %v970 = vadd.f32 %v620, %v969
    %971 = vmatmul.f32.gmra.mxu0 %v326
    %v972 = vpop.f32.mrf.mxu0
    %v973 = vadd.f32 %v623, %v972
    %974 = vmatmul.f32.gmra.mxu0 %v328
    %v975 = vpop.f32.mrf.mxu0
    %v976 = vadd.f32 %v626, %v975
    %977 = vmatmul.f32.gmra.mxu0 %v330
    %v978 = vpop.f32.mrf.mxu0
    %v979 = vadd.f32 %v629, %v978
    %980 = vmatmul.f32.gmra.mxu0 %v332
    %v981 = vpop.f32.mrf.mxu0
    %v982 = vadd.f32 %v632, %v981
    %983 = vmatmul.f32.gmra.mxu0 %v334
    %v984 = vpop.f32.mrf.mxu0
    %v985 = vadd.f32 %v635, %v984
    %986 = vmatmul.f32.gmra.mxu0 %v336
    %v987 = vpop.f32.mrf.mxu0
    %v988 = vadd.f32 %v638, %v987
    %989 = vmatmul.f32.gmra.mxu0 %v338
    %v990 = vpop.f32.mrf.mxu0
    %v991 = vadd.f32 %v641, %v990
    %992 = vmatmul.f32.gmra.mxu0 %v340
    %v993 = vpop.f32.mrf.mxu0
    %v994 = vadd.f32 %v644, %v993
    %995 = vmatmul.f32.gmra.mxu0 %v342
    %v996 = vpop.f32.mrf.mxu0
    %v997 = vadd.f32 %v647, %v996
    %998 = vmatmul.f32.gmra.mxu0 %v344
    %v999 = vpop.f32.mrf.mxu0
    %v1000 = vadd.f32 %v650, %v999
    %1001 = vmatmul.f32.gmra.mxu0 %v346
    %v1002 = vpop.f32.mrf.mxu0
    %v1003 = vadd.f32 %v653, %v1002
    %1004 = vmatmul.f32.gmra.mxu0 %v348
    %v1005 = vpop.f32.mrf.mxu0
    %v1006 = vadd.f32 %v656, %v1005
    %1007 = vmatmul.f32.gmra.mxu0 %v350
    %v1008 = vpop.f32.mrf.mxu0
    %v1009 = vadd.f32 %v659, %v1008
    %1010 = vmatmul.f32.gmra.mxu0 %v352
    %v1011 = vpop.f32.mrf.mxu0
    %v1012 = vadd.f32 %v662, %v1011
    %1013 = vmatmul.f32.gmra.mxu0 %v354
    %v1014 = vpop.f32.mrf.mxu0
    %v1015 = vadd.f32 %v665, %v1014
    %1016 = vmatmul.f32.gmra.mxu0 %v356
    %v1017 = vpop.f32.mrf.mxu0
    %v1018 = vadd.f32 %v668, %v1017
    %1019 = vmatmul.f32.gmra.mxu0 %v358
    %v1020 = vpop.f32.mrf.mxu0
    %v1021 = vadd.f32 %v671, %v1020
    %1022 = vmatmul.f32.gmra.mxu0 %v360
    %v1023 = vpop.f32.mrf.mxu0
    %v1024 = vadd.f32 %v674, %v1023
    %1025 = vmatmul.f32.gmra.mxu0 %v362
    %v1026 = vpop.f32.mrf.mxu0
    %v1027 = vadd.f32 %v677, %v1026
    %1028 = vmatmul.f32.gmra.mxu0 %v364
    %v1029 = vpop.f32.mrf.mxu0
    %v1030 = vadd.f32 %v680, %v1029
    %1031 = vmatmul.f32.gmra.mxu0 %v366
    %v1032 = vpop.f32.mrf.mxu0
    %v1033 = vadd.f32 %v683, %v1032
    %1034 = vmatmul.f32.gmra.mxu0 %v368
    %v1035 = vpop.f32.mrf.mxu0
    %v1036 = vadd.f32 %v686, %v1035
    %1037 = vmatmul.f32.gmra.mxu0 %v370
    %v1038 = vpop.f32.mrf.mxu0
    %v1039 = vadd.f32 %v689, %v1038
    %1040 = vmatmul.f32.gmra.mxu0 %v372
    %v1041 = vpop.f32.mrf.mxu0
    %v1042 = vadd.f32 %v692, %v1041
    %1043 = vmatmul.f32.gmra.mxu0 %v374
    %v1044 = vpop.f32.mrf.mxu0
    %v1045 = vadd.f32 %v695, %v1044
    %1046 = vmatmul.f32.gmra.mxu0 %v376
    %v1047 = vpop.f32.mrf.mxu0
    %v1048 = vadd.f32 %v698, %v1047
    %1049 = vmatmul.f32.gmra.mxu0 %v378
    %v1050 = vpop.f32.mrf.mxu0
    %v1051 = vadd.f32 %v701, %v1050
    %1052 = vmatmul.f32.gmra.mxu0 %v380
    %v1053 = vpop.f32.mrf.mxu0
    %v1054 = vadd.f32 %v704, %v1053
    %1055 = vmatmul.f32.gmra.mxu0 %v382
    %v1056 = vpop.f32.mrf.mxu0
    %v1057 = vadd.f32 %v707, %v1056
    %1058 = vmatmul.f32.gmra.mxu0 %v384
    %v1059 = vpop.f32.mrf.mxu0
    %v1060 = vadd.f32 %v710, %v1059
    %1061 = vmatmul.f32.gmra.mxu0 %v386
    %v1062 = vpop.f32.mrf.mxu0
    %v1063 = vadd.f32 %v713, %v1062
    %1064 = vmatmul.f32.gmra.mxu0 %v388
    %v1065 = vpop.f32.mrf.mxu0
    %v1066 = vadd.f32 %v716, %v1065
    %1067 = vmatmul.f32.gmra.mxu0 %v390
    %v1068 = vpop.f32.mrf.mxu0
    %v1069 = vadd.f32 %v719, %v1068
    %1070 = vmatmul.f32.gmra.mxu0 %v392
    %v1071 = vpop.f32.mrf.mxu0
    %v1072 = vadd.f32 %v722, %v1071
    %1073 = vmatmul.f32.gmra.mxu0 %v394
    %v1074 = vpop.f32.mrf.mxu0
    %v1075 = vadd.f32 %v725, %v1074
    %1076 = vmatmul.f32.gmra.mxu0 %v396
    %v1077 = vpop.f32.mrf.mxu0
    %v1078 = vadd.f32 %v728, %v1077
    %1079 = vmatmul.f32.gmra.mxu0 %v398
    %v1080 = vpop.f32.mrf.mxu0
    %v1081 = vadd.f32 %v731, %v1080
    %1082 = vmatmul.f32.gmra.mxu0 %v400
    %v1083 = vpop.f32.mrf.mxu0
    %v1084 = vadd.f32 %v734, %v1083
    %1085 = vmatmul.f32.gmra.mxu0 %v402
    %v1086 = vpop.f32.mrf.mxu0
    %v1087 = vadd.f32 %v737, %v1086
    %1088 = vmatmul.f32.gmra.mxu0 %v404
    %v1089 = vpop.f32.mrf.mxu0
    %v1090 = vadd.f32 %v740, %v1089
    %1091 = vmatmul.f32.gmra.mxu0 %v406
    %v1092 = vpop.f32.mrf.mxu0
    %v1093 = vadd.f32 %v743, %v1092
    %1094 = vmatmul.f32.gmra.mxu0 %v408
    %v1095 = vpop.f32.mrf.mxu0
    %v1096 = vadd.f32 %v746, %v1095
    %1097 = vmatmul.f32.gmra.mxu0 %v410
    %v1098 = vpop.f32.mrf.mxu0
    %v1099 = vadd.f32 %v749, %v1098
    %1100 = vmatmul.f32.gmra.mxu0 %v412
    %v1101 = vpop.f32.mrf.mxu0
    %v1102 = vadd.f32 %v752, %v1101
    %1103 = vmatmul.f32.gmra.mxu0 %v414
    %v1104 = vpop.f32.mrf.mxu0
    %v1105 = vadd.f32 %v755, %v1104
    %1106 = vmatmul.f32.gmra.mxu0 %v416
    %v1107 = vpop.f32.mrf.mxu0
    %v1108 = vadd.f32 %v758, %v1107
    %1109 = vmatmul.f32.gmra.mxu0 %v418
    %v1110 = vpop.f32.mrf.mxu0
    %v1111 = vadd.f32 %v761, %v1110
    %1112 = vmatmul.f32.gmra.mxu0 %v420
    %v1113 = vpop.f32.mrf.mxu0
    %v1114 = vadd.f32 %v764, %v1113
    %1115 = vmatmul.f32.gmra.mxu0 %v422
    %v1116 = vpop.f32.mrf.mxu0
    %v1117 = vadd.f32 %v767, %v1116
    %1118 = vmatmul.f32.gmra.mxu0 %v424
    %v1119 = vpop.f32.mrf.mxu0
    %v1120 = vadd.f32 %v770, %v1119
    %1121 = vmatmul.f32.gmra.mxu0 %v426
    %v1122 = vpop.f32.mrf.mxu0
    %v1123 = vadd.f32 %v773, %v1122
    %1124 = vmatmul.f32.gmra.mxu0 %v428
    %v1125 = vpop.f32.mrf.mxu0
    %v1126 = vadd.f32 %v776, %v1125
    %1127 = vmatmul.f32.gmra.mxu0 %v430
    %v1128 = vpop.f32.mrf.mxu0
    %v1129 = vadd.f32 %v779, %v1128
    %1130 = vmatmul.f32.gmra.mxu0 %v432
    %v1131 = vpop.f32.mrf.mxu0
    %v1132 = vadd.f32 %v782, %v1131
    %1133 = vmatmul.f32.gmra.mxu0 %v434
    %v1134 = vpop.f32.mrf.mxu0
    %v1135 = vadd.f32 %v785, %v1134
    %1136 = vmatmul.f32.gmra.mxu0 %v436
    %v1137 = vpop.f32.mrf.mxu0
    %v1138 = vadd.f32 %v788, %v1137
    %1139 = vmatmul.f32.gmra.mxu0 %v438
    %v1140 = vpop.f32.mrf.mxu0
    %v1141 = vadd.f32 %v791, %v1140
    %1142 = vmatmul.f32.gmra.mxu0 %v440
    %v1143 = vpop.f32.mrf.mxu0
    %v1144 = vadd.f32 %v794, %v1143
    %1145 = vmatmul.f32.gmra.mxu0 %v442
    %v1146 = vpop.f32.mrf.mxu0
    %v1147 = vadd.f32 %v797, %v1146
    %1148 = vmatmul.f32.gmra.mxu0 %v444
    %v1149 = vpop.f32.mrf.mxu0
    %v1150 = vadd.f32 %v800, %v1149
    %1151 = vmatmul.f32.gmra.mxu0 %v446
    %v1152 = vpop.f32.mrf.mxu0
    %v1153 = vadd.f32 %v803, %v1152
    %1154 = vmatmul.f32.gmra.mxu0 %v448
    %v1155 = vpop.f32.mrf.mxu0
    %v1156 = vadd.f32 %v806, %v1155
    %1157 = vmatmul.f32.gmra.mxu0 %v450
    %v1158 = vpop.f32.mrf.mxu0
    %v1159 = vadd.f32 %v809, %v1158
    %1160 = vmatmul.f32.gmra.mxu0 %v452
    %v1161 = vpop.f32.mrf.mxu0
    %v1162 = vadd.f32 %v812, %v1161
    %1163 = vmatmul.f32.gmra.mxu0 %v454
    %v1164 = vpop.f32.mrf.mxu0
    %v1165 = vadd.f32 %v815, %v1164
    %1166 = vmatmul.f32.gmra.mxu0 %v456
    %v1167 = vpop.f32.mrf.mxu0
    %v1168 = vadd.f32 %v818, %v1167
    %1169 = vmatmul.f32.gmra.mxu0 %v458
    %v1170 = vpop.f32.mrf.mxu0
    %v1171 = vadd.f32 %v821, %v1170
    %1172 = vmatmul.f32.gmra.mxu0 %v460
    %v1173 = vpop.f32.mrf.mxu0
    %v1174 = vadd.f32 %v824, %v1173
    %1175 = vmatmul.f32.gmra.mxu0 %v462
    %v1176 = vpop.f32.mrf.mxu0
    %v1177 = vadd.f32 %v827, %v1176
    %1178 = vmatmul.f32.gmra.mxu0 %v464
    %v1179 = vpop.f32.mrf.mxu0
    %v1180 = vadd.f32 %v830, %v1179
    %1181 = vmatmul.f32.gmra.mxu0 %v466
    %v1182 = vpop.f32.mrf.mxu0
    %v1183 = vadd.f32 %v833, %v1182
    %1184 = vmatmul.f32.gmra.mxu0 %v468
    %v1185 = vpop.f32.mrf.mxu0
    %v1186 = vadd.f32 %v836, %v1185
    %1187 = vmatmul.f32.gmra.mxu0 %v470
    %v1188 = vpop.f32.mrf.mxu0
    %v1189 = vadd.f32 %v839, %v1188
    %1190 = vmatmul.f32.gmra.mxu0 %v472
    %v1191 = vpop.f32.mrf.mxu0
    %v1192 = vadd.f32 %v842, %v1191
    %1193 = vmatmul.f32.gmra.mxu0 %v474
    %v1194 = vpop.f32.mrf.mxu0
    %v1195 = vadd.f32 %v845, %v1194
    %1196 = vmatmul.f32.gmra.mxu0 %v476
    %v1197 = vpop.f32.mrf.mxu0
    %v1198 = vadd.f32 %v848, %v1197
    %1199 = vmatmul.f32.gmra.mxu0 %v478
    %v1200 = vpop.f32.mrf.mxu0
    %v1201 = vadd.f32 %v851, %v1200
    %1202 = vmatmul.f32.gmra.mxu0 %v480
    %v1203 = vpop.f32.mrf.mxu0
    %v1204 = vadd.f32 %v854, %v1203
    %1205 = vmatmul.f32.gmra.mxu0 %v482
    %v1206 = vpop.f32.mrf.mxu0
    %v1207 = vadd.f32 %v857, %v1206
    %1208 = vmatmul.f32.gmra.mxu0 %v484
    %v1209 = vpop.f32.mrf.mxu0
    %v1210 = vadd.f32 %v860, %v1209
    %1211 = vmatmul.f32.gmra.mxu0 %v486
    %v1212 = vpop.f32.mrf.mxu0
    %v1213 = vadd.f32 %v863, %v1212
    %1214 = vmatmul.f32.gmra.mxu0 %v488
    %v1215 = vpop.f32.mrf.mxu0
    %v1216 = vadd.f32 %v866, %v1215
    %1217 = vmatmul.f32.gmra.mxu0 %v490
    %v1218 = vpop.f32.mrf.mxu0
    %v1219 = vadd.f32 %v869, %v1218
    %1220 = vmatmul.f32.gmra.mxu0 %v492
    %v1221 = vpop.f32.mrf.mxu0
    %v1222 = vadd.f32 %v872, %v1221
    %1223 = vmatmul.f32.gmra.mxu0 %v494
    %v1224 = vpop.f32.mrf.mxu0
    %v1225 = vadd.f32 %v875, %v1224
    %1226 = vdwg.mxu0
    %v1227 = vadd.f32 %v162, %v895
    %v1228 = vadd.f32 %v163, %v898
    %v1229 = vadd.f32 %v164, %v901
    %v1230 = vadd.f32 %v165, %v904
    %v1231 = vadd.f32 %v166, %v907
    %v1232 = vadd.f32 %v167, %v910
    %v1233 = vadd.f32 %v168, %v913
    %v1234 = vadd.f32 %v169, %v916
    %v1235 = vadd.f32 %v170, %v919
    %v1236 = vadd.f32 %v171, %v922
    %v1237 = vadd.f32 %v172, %v925
    %v1238 = vadd.f32 %v173, %v928
    %v1239 = vadd.f32 %v174, %v931
    %v1240 = vadd.f32 %v175, %v934
    %v1241 = vadd.f32 %v176, %v937
    %v1242 = vadd.f32 %v177, %v940
    %v1243 = vadd.f32 %v178, %v943
    %v1244 = vadd.f32 %v179, %v946
    %v1245 = vadd.f32 %v180, %v949
    %v1246 = vadd.f32 %v181, %v952
    %v1247 = vadd.f32 %v182, %v955
    %v1248 = vadd.f32 %v183, %v958
    %v1249 = vadd.f32 %v184, %v961
    %v1250 = vadd.f32 %v185, %v964
    %v1251 = vadd.f32 %v186, %v967
    %v1252 = vadd.f32 %v187, %v970
    %v1253 = vadd.f32 %v188, %v973
    %v1254 = vadd.f32 %v189, %v976
    %v1255 = vadd.f32 %v190, %v979
    %v1256 = vadd.f32 %v191, %v982
    %v1257 = vadd.f32 %v192, %v985
    %v1258 = vadd.f32 %v193, %v988
    %v1259 = vadd.f32 %v194, %v991
    %v1260 = vadd.f32 %v195, %v994
    %v1261 = vadd.f32 %v196, %v997
    %v1262 = vadd.f32 %v197, %v1000
    %v1263 = vadd.f32 %v198, %v1003
    %v1264 = vadd.f32 %v199, %v1006
    %v1265 = vadd.f32 %v200, %v1009
    %v1266 = vadd.f32 %v201, %v1012
    %v1267 = vadd.f32 %v202, %v1015
    %v1268 = vadd.f32 %v203, %v1018
    %v1269 = vadd.f32 %v204, %v1021
    %v1270 = vadd.f32 %v205, %v1024
    %v1271 = vadd.f32 %v206, %v1027
    %v1272 = vadd.f32 %v207, %v1030
    %v1273 = vadd.f32 %v208, %v1033
    %v1274 = vadd.f32 %v209, %v1036
    %v1275 = vadd.f32 %v210, %v1039
    %v1276 = vadd.f32 %v211, %v1042
    %v1277 = vadd.f32 %v212, %v1045
    %v1278 = vadd.f32 %v213, %v1048
    %v1279 = vadd.f32 %v214, %v1051
    %v1280 = vadd.f32 %v215, %v1054
    %v1281 = vadd.f32 %v216, %v1057
    %v1282 = vadd.f32 %v217, %v1060
    %v1283 = vadd.f32 %v218, %v1063
    %v1284 = vadd.f32 %v219, %v1066
    %v1285 = vadd.f32 %v220, %v1069
    %v1286 = vadd.f32 %v221, %v1072
    %v1287 = vadd.f32 %v222, %v1075
    %v1288 = vadd.f32 %v223, %v1078
    %v1289 = vadd.f32 %v224, %v1081
    %v1290 = vadd.f32 %v225, %v1084
    %v1291 = vadd.f32 %v226, %v1087
    %v1292 = vadd.f32 %v227, %v1090
    %v1293 = vadd.f32 %v228, %v1093
    %v1294 = vadd.f32 %v229, %v1096
    %v1295 = vadd.f32 %v230, %v1099
    %v1296 = vadd.f32 %v231, %v1102
    %v1297 = vadd.f32 %v232, %v1105
    %v1298 = vadd.f32 %v233, %v1108
    %v1299 = vadd.f32 %v234, %v1111
    %v1300 = vadd.f32 %v235, %v1114
    %v1301 = vadd.f32 %v236, %v1117
    %v1302 = vadd.f32 %v237, %v1120
    %v1303 = vadd.f32 %v238, %v1123
    %v1304 = vadd.f32 %v239, %v1126
    %v1305 = vadd.f32 %v240, %v1129
    %v1306 = vadd.f32 %v241, %v1132
    %v1307 = vadd.f32 %v242, %v1135
    %v1308 = vadd.f32 %v243, %v1138
    %v1309 = vadd.f32 %v244, %v1141
    %v1310 = vadd.f32 %v245, %v1144
    %v1311 = vadd.f32 %v246, %v1147
    %v1312 = vadd.f32 %v247, %v1150
    %v1313 = vadd.f32 %v248, %v1153
    %v1314 = vadd.f32 %v249, %v1156
    %v1315 = vadd.f32 %v250, %v1159
    %v1316 = vadd.f32 %v251, %v1162
    %v1317 = vadd.f32 %v252, %v1165
    %v1318 = vadd.f32 %v253, %v1168
    %v1319 = vadd.f32 %v254, %v1171
    %v1320 = vadd.f32 %v255, %v1174
    %v1321 = vadd.f32 %v256, %v1177
    %v1322 = vadd.f32 %v257, %v1180
    %v1323 = vadd.f32 %v258, %v1183
    %v1324 = vadd.f32 %v259, %v1186
    %v1325 = vadd.f32 %v260, %v1189
    %v1326 = vadd.f32 %v261, %v1192
    %v1327 = vadd.f32 %v262, %v1195
    %v1328 = vadd.f32 %v263, %v1198
    %v1329 = vadd.f32 %v264, %v1201
    %v1330 = vadd.f32 %v265, %v1204
    %v1331 = vadd.f32 %v266, %v1207
    %v1332 = vadd.f32 %v267, %v1210
    %v1333 = vadd.f32 %v268, %v1213
    %v1334 = vadd.f32 %v269, %v1216
    %v1335 = vadd.f32 %v270, %v1219
    %v1336 = vadd.f32 %v271, %v1222
    %v1337 = vadd.f32 %v272, %v1225
    %1338 = vst [vmem:[#allocation2] sm:$0xff] %v1227
    %1339 = vst [vmem:[#allocation2 + $0x8] sm:$0xff] %v1228
    %1340 = vst [vmem:[#allocation2 + $0x10] sm:$0xff] %v1229
    %1341 = vst [vmem:[#allocation2 + $0x18] sm:$0xff] %v1230
    %1342 = vst [vmem:[#allocation2 + $0x20] sm:$0xff] %v1231
    %1343 = vst [vmem:[#allocation2 + $0x28] sm:$0xff] %v1232
    %1344 = vst [vmem:[#allocation2 + $0x30] sm:$0xff] %v1233
    %1345 = vst [vmem:[#allocation2 + $0x38] sm:$0xff] %v1234
    %1346 = vst [vmem:[#allocation2 + $0x40] sm:$0xff] %v1235
    %1347 = vst [vmem:[#allocation2 + $0x48] sm:$0xff] %v1236
    %1348 = vst [vmem:[#allocation2 + $0x50] sm:$0xff] %v1237
    %1349 = vst [vmem:[#allocation2 + $0x58] sm:$0xff] %v1238
    %1350 = vst [vmem:[#allocation2 + $0x60] sm:$0xff] %v1239
    %1351 = vst [vmem:[#allocation2 + $0x68] sm:$0xff] %v1240
    %1352 = vst [vmem:[#allocation2 + $0x70] sm:$0xff] %v1241
    %1353 = vst [vmem:[#allocation2 + $0x78] sm:$0xff] %v1242
    %1354 = vst [vmem:[#allocation2 + $0x80] sm:$0xff] %v1243
    %1355 = vst [vmem:[#allocation2 + $0x88] sm:$0xff] %v1244
    %1356 = vst [vmem:[#allocation2 + $0x90] sm:$0xff] %v1245
    %1357 = vst [vmem:[#allocation2 + $0x98] sm:$0xff] %v1246
    %1358 = vst [vmem:[#allocation2 + $0xa0] sm:$0xff] %v1247
    %1359 = vst [vmem:[#allocation2 + $0xa8] sm:$0xff] %v1248
    %1360 = vst [vmem:[#allocation2 + $0xb0] sm:$0xff] %v1249
    %1361 = vst [vmem:[#allocation2 + $0xb8] sm:$0xff] %v1250
    %1362 = vst [vmem:[#allocation2 + $0xc0] sm:$0xff] %v1251
    %1363 = vst [vmem:[#allocation2 + $0xc8] sm:$0xff] %v1252
    %1364 = vst [vmem:[#allocation2 + $0xd0] sm:$0xff] %v1253
    %1365 = vst [vmem:[#allocation2 + $0xd8] sm:$0xff] %v1254
    %1366 = vst [vmem:[#allocation2 + $0xe0] sm:$0xff] %v1255
    %1367 = vst [vmem:[#allocation2 + $0xe8] sm:$0xff] %v1256
    %1368 = vst [vmem:[#allocation2 + $0xf0] sm:$0xff] %v1257
    %1369 = vst [vmem:[#allocation2 + $0xf8] sm:$0xff] %v1258
    %1370 = vst [vmem:[#allocation2 + $0x100] sm:$0xff] %v1259
    %1371 = vst [vmem:[#allocation2 + $0x108] sm:$0xff] %v1260
    %1372 = vst [vmem:[#allocation2 + $0x110] sm:$0xff] %v1261
    %1373 = vst [vmem:[#allocation2 + $0x118] sm:$0xff] %v1262
    %1374 = vst [vmem:[#allocation2 + $0x120] sm:$0xff] %v1263
    %1375 = vst [vmem:[#allocation2 + $0x128] sm:$0xff] %v1264
    %1376 = vst [vmem:[#allocation2 + $0x130] sm:$0xff] %v1265
    %1377 = vst [vmem:[#allocation2 + $0x138] sm:$0xff] %v1266
    %1378 = vst [vmem:[#allocation2 + $0x140] sm:$0xff] %v1267
    %1379 = vst [vmem:[#allocation2 + $0x148] sm:$0xff] %v1268
    %1380 = vst [vmem:[#allocation2 + $0x150] sm:$0xff] %v1269
    %1381 = vst [vmem:[#allocation2 + $0x158] sm:$0xff] %v1270
    %1382 = vst [vmem:[#allocation2 + $0x160] sm:$0xff] %v1271
    %1383 = vst [vmem:[#allocation2 + $0x168] sm:$0xff] %v1272
    %1384 = vst [vmem:[#allocation2 + $0x170] sm:$0xff] %v1273
    %1385 = vst [vmem:[#allocation2 + $0x178] sm:$0xff] %v1274
    %1386 = vst [vmem:[#allocation2 + $0x180] sm:$0xff] %v1275
    %1387 = vst [vmem:[#allocation2 + $0x188] sm:$0xff] %v1276
    %1388 = vst [vmem:[#allocation2 + $0x190] sm:$0xff] %v1277
    %1389 = vst [vmem:[#allocation2 + $0x198] sm:$0xff] %v1278
    %1390 = vst [vmem:[#allocation2 + $0x1a0] sm:$0xff] %v1279
    %1391 = vst [vmem:[#allocation2 + $0x1a8] sm:$0xff] %v1280
    %1392 = vst [vmem:[#allocation2 + $0x1b0] sm:$0xff] %v1281
    %1393 = vst [vmem:[#allocation2 + $0x1b8] sm:$0xff] %v1282
    %1394 = vst [vmem:[#allocation2 + $0x1c0] sm:$0xff] %v1283
    %1395 = vst [vmem:[#allocation2 + $0x1c8] sm:$0xff] %v1284
    %1396 = vst [vmem:[#allocation2 + $0x1d0] sm:$0xff] %v1285
    %1397 = vst [vmem:[#allocation2 + $0x1d8] sm:$0xff] %v1286
    %1398 = vst [vmem:[#allocation2 + $0x1e0] sm:$0xff] %v1287
    %1399 = vst [vmem:[#allocation2 + $0x1e8] sm:$0xff] %v1288
    %1400 = vst [vmem:[#allocation2 + $0x1f0] sm:$0xff] %v1289
    %1401 = vst [vmem:[#allocation2 + $0x1f8] sm:$0xff] %v1290
    %1402 = vst [vmem:[#allocation2 + $0x200] sm:$0xff] %v1291
    %1403 = vst [vmem:[#allocation2 + $0x208] sm:$0xff] %v1292
    %1404 = vst [vmem:[#allocation2 + $0x210] sm:$0xff] %v1293
    %1405 = vst [vmem:[#allocation2 + $0x218] sm:$0xff] %v1294
    %1406 = vst [vmem:[#allocation2 + $0x220] sm:$0xff] %v1295
    %1407 = vst [vmem:[#allocation2 + $0x228] sm:$0xff] %v1296
    %1408 = vst [vmem:[#allocation2 + $0x230] sm:$0xff] %v1297
    %1409 = vst [vmem:[#allocation2 + $0x238] sm:$0xff] %v1298
    %1410 = vst [vmem:[#allocation2 + $0x240] sm:$0xff] %v1299
    %1411 = vst [vmem:[#allocation2 + $0x248] sm:$0xff] %v1300
    %1412 = vst [vmem:[#allocation2 + $0x250] sm:$0xff] %v1301
    %1413 = vst [vmem:[#allocation2 + $0x258] sm:$0xff] %v1302
    %1414 = vst [vmem:[#allocation2 + $0x260] sm:$0xff] %v1303
    %1415 = vst [vmem:[#allocation2 + $0x268] sm:$0xff] %v1304
    %1416 = vst [vmem:[#allocation2 + $0x270] sm:$0xff] %v1305
    %1417 = vst [vmem:[#allocation2 + $0x278] sm:$0xff] %v1306
    %1418 = vst [vmem:[#allocation2 + $0x280] sm:$0xff] %v1307
    %1419 = vst [vmem:[#allocation2 + $0x288] sm:$0xff] %v1308
    %1420 = vst [vmem:[#allocation2 + $0x290] sm:$0xff] %v1309
    %1421 = vst [vmem:[#allocation2 + $0x298] sm:$0xff] %v1310
    %1422 = vst [vmem:[#allocation2 + $0x2a0] sm:$0xff] %v1311
    %1423 = vst [vmem:[#allocation2 + $0x2a8] sm:$0xff] %v1312
    %1424 = vst [vmem:[#allocation2 + $0x2b0] sm:$0xff] %v1313
    %1425 = vst [vmem:[#allocation2 + $0x2b8] sm:$0xff] %v1314
    %1426 = vst [vmem:[#allocation2 + $0x2c0] sm:$0xff] %v1315
    %1427 = vst [vmem:[#allocation2 + $0x2c8] sm:$0xff] %v1316
    %1428 = vst [vmem:[#allocation2 + $0x2d0] sm:$0xff] %v1317
    %1429 = vst [vmem:[#allocation2 + $0x2d8] sm:$0xff] %v1318
    %1430 = vst [vmem:[#allocation2 + $0x2e0] sm:$0xff] %v1319
    %1431 = vst [vmem:[#allocation2 + $0x2e8] sm:$0xff] %v1320
    %1432 = vst [vmem:[#allocation2 + $0x2f0] sm:$0xff] %v1321
    %1433 = vst [vmem:[#allocation2 + $0x2f8] sm:$0xff] %v1322
    %1434 = vst [vmem:[#allocation2 + $0x300] sm:$0xff] %v1323
    %1435 = vst [vmem:[#allocation2 + $0x308] sm:$0xff] %v1324
    %1436 = vst [vmem:[#allocation2 + $0x310] sm:$0xff] %v1325
    %1437 = vst [vmem:[#allocation2 + $0x318] sm:$0xff] %v1326
    %1438 = vst [vmem:[#allocation2 + $0x320] sm:$0xff] %v1327
    %1439 = vst [vmem:[#allocation2 + $0x328] sm:$0xff] %v1328
    %1440 = vst [vmem:[#allocation2 + $0x330] sm:$0xff] %v1329
    %1441 = vst [vmem:[#allocation2 + $0x338] sm:$0xff] %v1330
    %1442 = vst [vmem:[#allocation2 + $0x340] sm:$0xff] %v1331
    %1443 = vst [vmem:[#allocation2 + $0x348] sm:$0xff] %v1332
    %1444 = vst [vmem:[#allocation2 + $0x350] sm:$0xff] %v1333
    %1445 = vst [vmem:[#allocation2 + $0x358] sm:$0xff] %v1334
    %1446 = vst [vmem:[#allocation2 + $0x360] sm:$0xff] %v1335
    %1447 = vst [vmem:[#allocation2 + $0x368] sm:$0xff] %v1336
    %1448 = vst [vmem:[#allocation2 + $0x370] sm:$0x3] %v1337
    // Predicated region
    $region26: #{tpu_custom_call.1} parent=1 // pred_check
      %p1449 = pneg %p47
    $region27: #{tpu_custom_call.1} parent=1 // pred_check_branch
      %1451 = sbr.rel (%p1449) target = $region29
    $region28: #{tpu_custom_call.1} parent=1 // pred_region
      %v1452 = vld [vmem:[#allocation2] sm:$0xff]
      %v1453 = vld [vmem:[#allocation2 + $0x8] sm:$0xff]
      %v1454 = vld [vmem:[#allocation2 + $0x10] sm:$0xff]
      %v1455 = vld [vmem:[#allocation2 + $0x18] sm:$0xff]
      %v1456 = vld [vmem:[#allocation2 + $0x20] sm:$0xff]
      %v1457 = vld [vmem:[#allocation2 + $0x28] sm:$0xff]
      %v1458 = vld [vmem:[#allocation2 + $0x30] sm:$0xff]
      %v1459 = vld [vmem:[#allocation2 + $0x38] sm:$0xff]
      %v1460 = vld [vmem:[#allocation2 + $0x40] sm:$0xff]
      %v1461 = vld [vmem:[#allocation2 + $0x48] sm:$0xff]
      %v1462 = vld [vmem:[#allocation2 + $0x50] sm:$0xff]
      %v1463 = vld [vmem:[#allocation2 + $0x58] sm:$0xff]
      %v1464 = vld [vmem:[#allocation2 + $0x60] sm:$0xff]
      %v1465 = vld [vmem:[#allocation2 + $0x68] sm:$0xff]
      %v1466 = vld [vmem:[#allocation2 + $0x70] sm:$0xff]
      %v1467 = vld [vmem:[#allocation2 + $0x78] sm:$0xff]
      %v1468 = vld [vmem:[#allocation2 + $0x80] sm:$0xff]
      %v1469 = vld [vmem:[#allocation2 + $0x88] sm:$0xff]
      %v1470 = vld [vmem:[#allocation2 + $0x90] sm:$0xff]
      %v1471 = vld [vmem:[#allocation2 + $0x98] sm:$0xff]
      %v1472 = vld [vmem:[#allocation2 + $0xa0] sm:$0xff]
      %v1473 = vld [vmem:[#allocation2 + $0xa8] sm:$0xff]
      %v1474 = vld [vmem:[#allocation2 + $0xb0] sm:$0xff]
      %v1475 = vld [vmem:[#allocation2 + $0xb8] sm:$0xff]
      %v1476 = vld [vmem:[#allocation2 + $0xc0] sm:$0xff]
      %v1477 = vld [vmem:[#allocation2 + $0xc8] sm:$0xff]
      %v1478 = vld [vmem:[#allocation2 + $0xd0] sm:$0xff]
      %v1479 = vld [vmem:[#allocation2 + $0xd8] sm:$0xff]
      %v1480 = vld [vmem:[#allocation2 + $0xe0] sm:$0xff]
      %v1481 = vld [vmem:[#allocation2 + $0xe8] sm:$0xff]
      %v1482 = vld [vmem:[#allocation2 + $0xf0] sm:$0xff]
      %v1483 = vld [vmem:[#allocation2 + $0xf8] sm:$0xff]
      %v1484 = vld [vmem:[#allocation2 + $0x100] sm:$0xff]
      %v1485 = vld [vmem:[#allocation2 + $0x108] sm:$0xff]
      %v1486 = vld [vmem:[#allocation2 + $0x110] sm:$0xff]
      %v1487 = vld [vmem:[#allocation2 + $0x118] sm:$0xff]
      %v1488 = vld [vmem:[#allocation2 + $0x120] sm:$0xff]
      %v1489 = vld [vmem:[#allocation2 + $0x128] sm:$0xff]
      %v1490 = vld [vmem:[#allocation2 + $0x130] sm:$0xff]
      %v1491 = vld [vmem:[#allocation2 + $0x138] sm:$0xff]
      %v1492 = vld [vmem:[#allocation2 + $0x140] sm:$0xff]
      %v1493 = vld [vmem:[#allocation2 + $0x148] sm:$0xff]
      %v1494 = vld [vmem:[#allocation2 + $0x150] sm:$0xff]
      %v1495 = vld [vmem:[#allocation2 + $0x158] sm:$0xff]
      %v1496 = vld [vmem:[#allocation2 + $0x160] sm:$0xff]
      %v1497 = vld [vmem:[#allocation2 + $0x168] sm:$0xff]
      %v1498 = vld [vmem:[#allocation2 + $0x170] sm:$0xff]
      %v1499 = vld [vmem:[#allocation2 + $0x178] sm:$0xff]
      %v1500 = vld [vmem:[#allocation2 + $0x180] sm:$0xff]
      %v1501 = vld [vmem:[#allocation2 + $0x188] sm:$0xff]
      %v1502 = vld [vmem:[#allocation2 + $0x190] sm:$0xff]
      %v1503 = vld [vmem:[#allocation2 + $0x198] sm:$0xff]
      %v1504 = vld [vmem:[#allocation2 + $0x1a0] sm:$0xff]
      %v1505 = vld [vmem:[#allocation2 + $0x1a8] sm:$0xff]
      %v1506 = vld [vmem:[#allocation2 + $0x1b0] sm:$0xff]
      %v1507 = vld [vmem:[#allocation2 + $0x1b8] sm:$0xff]
      %v1508 = vld [vmem:[#allocation2 + $0x1c0] sm:$0xff]
      %v1509 = vld [vmem:[#allocation2 + $0x1c8] sm:$0xff]
      %v1510 = vld [vmem:[#allocation2 + $0x1d0] sm:$0xff]
      %v1511 = vld [vmem:[#allocation2 + $0x1d8] sm:$0xff]
      %v1512 = vld [vmem:[#allocation2 + $0x1e0] sm:$0xff]
      %v1513 = vld [vmem:[#allocation2 + $0x1e8] sm:$0xff]
      %v1514 = vld [vmem:[#allocation2 + $0x1f0] sm:$0xff]
      %v1515 = vld [vmem:[#allocation2 + $0x1f8] sm:$0xff]
      %v1516 = vld [vmem:[#allocation2 + $0x200] sm:$0xff]
      %v1517 = vld [vmem:[#allocation2 + $0x208] sm:$0xff]
      %v1518 = vld [vmem:[#allocation2 + $0x210] sm:$0xff]
      %v1519 = vld [vmem:[#allocation2 + $0x218] sm:$0xff]
      %v1520 = vld [vmem:[#allocation2 + $0x220] sm:$0xff]
      %v1521 = vld [vmem:[#allocation2 + $0x228] sm:$0xff]
      %v1522 = vld [vmem:[#allocation2 + $0x230] sm:$0xff]
      %v1523 = vld [vmem:[#allocation2 + $0x238] sm:$0xff]
      %v1524 = vld [vmem:[#allocation2 + $0x240] sm:$0xff]
      %v1525 = vld [vmem:[#allocation2 + $0x248] sm:$0xff]
      %v1526 = vld [vmem:[#allocation2 + $0x250] sm:$0xff]
      %v1527 = vld [vmem:[#allocation2 + $0x258] sm:$0xff]
      %v1528 = vld [vmem:[#allocation2 + $0x260] sm:$0xff]
      %v1529 = vld [vmem:[#allocation2 + $0x268] sm:$0xff]
      %v1530 = vld [vmem:[#allocation2 + $0x270] sm:$0xff]
      %v1531 = vld [vmem:[#allocation2 + $0x278] sm:$0xff]
      %v1532 = vld [vmem:[#allocation2 + $0x280] sm:$0xff]
      %v1533 = vld [vmem:[#allocation2 + $0x288] sm:$0xff]
      %v1534 = vld [vmem:[#allocation2 + $0x290] sm:$0xff]
      %v1535 = vld [vmem:[#allocation2 + $0x298] sm:$0xff]
      %v1536 = vld [vmem:[#allocation2 + $0x2a0] sm:$0xff]
      %v1537 = vld [vmem:[#allocation2 + $0x2a8] sm:$0xff]
      %v1538 = vld [vmem:[#allocation2 + $0x2b0] sm:$0xff]
      %v1539 = vld [vmem:[#allocation2 + $0x2b8] sm:$0xff]
      %v1540 = vld [vmem:[#allocation2 + $0x2c0] sm:$0xff]
      %v1541 = vld [vmem:[#allocation2 + $0x2c8] sm:$0xff]
      %v1542 = vld [vmem:[#allocation2 + $0x2d0] sm:$0xff]
      %v1543 = vld [vmem:[#allocation2 + $0x2d8] sm:$0xff]
      %v1544 = vld [vmem:[#allocation2 + $0x2e0] sm:$0xff]
      %v1545 = vld [vmem:[#allocation2 + $0x2e8] sm:$0xff]
      %v1546 = vld [vmem:[#allocation2 + $0x2f0] sm:$0xff]
      %v1547 = vld [vmem:[#allocation2 + $0x2f8] sm:$0xff]
      %v1548 = vld [vmem:[#allocation2 + $0x300] sm:$0xff]
      %v1549 = vld [vmem:[#allocation2 + $0x308] sm:$0xff]
      %v1550 = vld [vmem:[#allocation2 + $0x310] sm:$0xff]
      %v1551 = vld [vmem:[#allocation2 + $0x318] sm:$0xff]
      %v1552 = vld [vmem:[#allocation2 + $0x320] sm:$0xff]
      %v1553 = vld [vmem:[#allocation2 + $0x328] sm:$0xff]
      %v1554 = vld [vmem:[#allocation2 + $0x330] sm:$0xff]
      %v1555 = vld [vmem:[#allocation2 + $0x338] sm:$0xff]
      %v1556 = vld [vmem:[#allocation2 + $0x340] sm:$0xff]
      %v1557 = vld [vmem:[#allocation2 + $0x348] sm:$0xff]
      %v1558 = vld [vmem:[#allocation2 + $0x350] sm:$0xff]
      %v1559 = vld [vmem:[#allocation2 + $0x358] sm:$0xff]
      %v1560 = vld [vmem:[#allocation2 + $0x360] sm:$0xff]
      %v1561 = vld [vmem:[#allocation2 + $0x368] sm:$0xff]
      %v1562 = vld [vmem:[#allocation2 + $0x370] sm:$0x3]
      %v1563 = vld [vmem:[%s2] sm:$0x1]
      %v1565 = vperm.slane %v1563, 0
      %v1567 = vadd.f32 %v1452, %v1565
      %v1568 = vadd.f32 %v1453, %v1565
      %v1569 = vadd.f32 %v1454, %v1565
      %v1570 = vadd.f32 %v1455, %v1565
      %v1571 = vadd.f32 %v1456, %v1565
      %v1572 = vadd.f32 %v1457, %v1565
      %v1573 = vadd.f32 %v1458, %v1565
      %v1574 = vadd.f32 %v1459, %v1565
      %v1575 = vadd.f32 %v1460, %v1565
      %v1576 = vadd.f32 %v1461, %v1565
      %v1577 = vadd.f32 %v1462, %v1565
      %v1578 = vadd.f32 %v1463, %v1565
      %v1579 = vadd.f32 %v1464, %v1565
      %v1580 = vadd.f32 %v1465, %v1565
      %v1581 = vadd.f32 %v1466, %v1565
      %v1582 = vadd.f32 %v1467, %v1565
      %v1583 = vadd.f32 %v1468, %v1565
      %v1584 = vadd.f32 %v1469, %v1565
      %v1585 = vadd.f32 %v1470, %v1565
      %v1586 = vadd.f32 %v1471, %v1565
      %v1587 = vadd.f32 %v1472, %v1565
      %v1588 = vadd.f32 %v1473, %v1565
      %v1589 = vadd.f32 %v1474, %v1565
      %v1590 = vadd.f32 %v1475, %v1565
      %v1591 = vadd.f32 %v1476, %v1565
      %v1592 = vadd.f32 %v1477, %v1565
      %v1593 = vadd.f32 %v1478, %v1565
      %v1594 = vadd.f32 %v1479, %v1565
      %v1595 = vadd.f32 %v1480, %v1565
      %v1596 = vadd.f32 %v1481, %v1565
      %v1597 = vadd.f32 %v1482, %v1565
      %v1598 = vadd.f32 %v1483, %v1565
      %v1599 = vadd.f32 %v1484, %v1565
      %v1600 = vadd.f32 %v1485, %v1565
      %v1601 = vadd.f32 %v1486, %v1565
      %v1602 = vadd.f32 %v1487, %v1565
      %v1603 = vadd.f32 %v1488, %v1565
      %v1604 = vadd.f32 %v1489, %v1565
      %v1605 = vadd.f32 %v1490, %v1565
      %v1606 = vadd.f32 %v1491, %v1565
      %v1607 = vadd.f32 %v1492, %v1565
      %v1608 = vadd.f32 %v1493, %v1565
      %v1609 = vadd.f32 %v1494, %v1565
      %v1610 = vadd.f32 %v1495, %v1565
      %v1611 = vadd.f32 %v1496, %v1565
      %v1612 = vadd.f32 %v1497, %v1565
      %v1613 = vadd.f32 %v1498, %v1565
      %v1614 = vadd.f32 %v1499, %v1565
      %v1615 = vadd.f32 %v1500, %v1565
      %v1616 = vadd.f32 %v1501, %v1565
      %v1617 = vadd.f32 %v1502, %v1565
      %v1618 = vadd.f32 %v1503, %v1565
      %v1619 = vadd.f32 %v1504, %v1565
      %v1620 = vadd.f32 %v1505, %v1565
      %v1621 = vadd.f32 %v1506, %v1565
      %v1622 = vadd.f32 %v1507, %v1565
      %v1623 = vadd.f32 %v1508, %v1565
      %v1624 = vadd.f32 %v1509, %v1565
      %v1625 = vadd.f32 %v1510, %v1565
      %v1626 = vadd.f32 %v1511, %v1565
      %v1627 = vadd.f32 %v1512, %v1565
      %v1628 = vadd.f32 %v1513, %v1565
      %v1629 = vadd.f32 %v1514, %v1565
      %v1630 = vadd.f32 %v1515, %v1565
      %v1631 = vadd.f32 %v1516, %v1565
      %v1632 = vadd.f32 %v1517, %v1565
      %v1633 = vadd.f32 %v1518, %v1565
      %v1634 = vadd.f32 %v1519, %v1565
      %v1635 = vadd.f32 %v1520, %v1565
      %v1636 = vadd.f32 %v1521, %v1565
      %v1637 = vadd.f32 %v1522, %v1565
      %v1638 = vadd.f32 %v1523, %v1565
      %v1639 = vadd.f32 %v1524, %v1565
      %v1640 = vadd.f32 %v1525, %v1565
      %v1641 = vadd.f32 %v1526, %v1565
      %v1642 = vadd.f32 %v1527, %v1565
      %v1643 = vadd.f32 %v1528, %v1565
      %v1644 = vadd.f32 %v1529, %v1565
      %v1645 = vadd.f32 %v1530, %v1565
      %v1646 = vadd.f32 %v1531, %v1565
      %v1647 = vadd.f32 %v1532, %v1565
      %v1648 = vadd.f32 %v1533, %v1565
      %v1649 = vadd.f32 %v1534, %v1565
      %v1650 = vadd.f32 %v1535, %v1565
      %v1651 = vadd.f32 %v1536, %v1565
      %v1652 = vadd.f32 %v1537, %v1565
      %v1653 = vadd.f32 %v1538, %v1565
      %v1654 = vadd.f32 %v1539, %v1565
      %v1655 = vadd.f32 %v1540, %v1565
      %v1656 = vadd.f32 %v1541, %v1565
      %v1657 = vadd.f32 %v1542, %v1565
      %v1658 = vadd.f32 %v1543, %v1565
      %v1659 = vadd.f32 %v1544, %v1565
      %v1660 = vadd.f32 %v1545, %v1565
      %v1661 = vadd.f32 %v1546, %v1565
      %v1662 = vadd.f32 %v1547, %v1565
      %v1663 = vadd.f32 %v1548, %v1565
      %v1664 = vadd.f32 %v1549, %v1565
      %v1665 = vadd.f32 %v1550, %v1565
      %v1666 = vadd.f32 %v1551, %v1565
      %v1667 = vadd.f32 %v1552, %v1565
      %v1668 = vadd.f32 %v1553, %v1565
      %v1669 = vadd.f32 %v1554, %v1565
      %v1670 = vadd.f32 %v1555, %v1565
      %v1671 = vadd.f32 %v1556, %v1565
      %v1672 = vadd.f32 %v1557, %v1565
      %v1673 = vadd.f32 %v1558, %v1565
      %v1674 = vadd.f32 %v1559, %v1565
      %v1675 = vadd.f32 %v1560, %v1565
      %v1676 = vadd.f32 %v1561, %v1565
      %v1677 = vadd.f32 %v1562, %v1565
      %v1678 = vmax.f32 %v1567, 0.0
      %v1679 = vmax.f32 %v1568, 0.0
      %v1680 = vmax.f32 %v1569, 0.0
      %v1681 = vmax.f32 %v1570, 0.0
      %v1682 = vmax.f32 %v1571, 0.0
      %v1683 = vmax.f32 %v1572, 0.0
      %v1684 = vmax.f32 %v1573, 0.0
      %v1685 = vmax.f32 %v1574, 0.0
      %v1686 = vmax.f32 %v1575, 0.0
      %v1687 = vmax.f32 %v1576, 0.0
      %v1688 = vmax.f32 %v1577, 0.0
      %v1689 = vmax.f32 %v1578, 0.0
      %v1690 = vmax.f32 %v1579, 0.0
      %v1691 = vmax.f32 %v1580, 0.0
      %v1692 = vmax.f32 %v1581, 0.0
      %v1693 = vmax.f32 %v1582, 0.0
      %v1694 = vmax.f32 %v1583, 0.0
      %v1695 = vmax.f32 %v1584, 0.0
      %v1696 = vmax.f32 %v1585, 0.0
      %v1697 = vmax.f32 %v1586, 0.0
      %v1698 = vmax.f32 %v1587, 0.0
      %v1699 = vmax.f32 %v1588, 0.0
      %v1700 = vmax.f32 %v1589, 0.0
      %v1701 = vmax.f32 %v1590, 0.0
      %v1702 = vmax.f32 %v1591, 0.0
      %v1703 = vmax.f32 %v1592, 0.0
      %v1704 = vmax.f32 %v1593, 0.0
      %v1705 = vmax.f32 %v1594, 0.0
      %v1706 = vmax.f32 %v1595, 0.0
      %v1707 = vmax.f32 %v1596, 0.0
      %v1708 = vmax.f32 %v1597, 0.0
      %v1709 = vmax.f32 %v1598, 0.0
      %v1710 = vmax.f32 %v1599, 0.0
      %v1711 = vmax.f32 %v1600, 0.0
      %v1712 = vmax.f32 %v1601, 0.0
      %v1713 = vmax.f32 %v1602, 0.0
      %v1714 = vmax.f32 %v1603, 0.0
      %v1715 = vmax.f32 %v1604, 0.0
      %v1716 = vmax.f32 %v1605, 0.0
      %v1717 = vmax.f32 %v1606, 0.0
      %v1718 = vmax.f32 %v1607, 0.0
      %v1719 = vmax.f32 %v1608, 0.0
      %v1720 = vmax.f32 %v1609, 0.0
      %v1721 = vmax.f32 %v1610, 0.0
      %v1722 = vmax.f32 %v1611, 0.0
      %v1723 = vmax.f32 %v1612, 0.0
      %v1724 = vmax.f32 %v1613, 0.0
      %v1725 = vmax.f32 %v1614, 0.0
      %v1726 = vmax.f32 %v1615, 0.0
      %v1727 = vmax.f32 %v1616, 0.0
      %v1728 = vmax.f32 %v1617, 0.0
      %v1729 = vmax.f32 %v1618, 0.0
      %v1730 = vmax.f32 %v1619, 0.0
      %v1731 = vmax.f32 %v1620, 0.0
      %v1732 = vmax.f32 %v1621, 0.0
      %v1733 = vmax.f32 %v1622, 0.0
      %v1734 = vmax.f32 %v1623, 0.0
      %v1735 = vmax.f32 %v1624, 0.0
      %v1736 = vmax.f32 %v1625, 0.0
      %v1737 = vmax.f32 %v1626, 0.0
      %v1738 = vmax.f32 %v1627, 0.0
      %v1739 = vmax.f32 %v1628, 0.0
      %v1740 = vmax.f32 %v1629, 0.0
      %v1741 = vmax.f32 %v1630, 0.0
      %v1742 = vmax.f32 %v1631, 0.0
      %v1743 = vmax.f32 %v1632, 0.0
      %v1744 = vmax.f32 %v1633, 0.0
      %v1745 = vmax.f32 %v1634, 0.0
      %v1746 = vmax.f32 %v1635, 0.0
      %v1747 = vmax.f32 %v1636, 0.0
      %v1748 = vmax.f32 %v1637, 0.0
      %v1749 = vmax.f32 %v1638, 0.0
      %v1750 = vmax.f32 %v1639, 0.0
      %v1751 = vmax.f32 %v1640, 0.0
      %v1752 = vmax.f32 %v1641, 0.0
      %v1753 = vmax.f32 %v1642, 0.0
      %v1754 = vmax.f32 %v1643, 0.0
      %v1755 = vmax.f32 %v1644, 0.0
      %v1756 = vmax.f32 %v1645, 0.0
      %v1757 = vmax.f32 %v1646, 0.0
      %v1758 = vmax.f32 %v1647, 0.0
      %v1759 = vmax.f32 %v1648, 0.0
      %v1760 = vmax.f32 %v1649, 0.0
      %v1761 = vmax.f32 %v1650, 0.0
      %v1762 = vmax.f32 %v1651, 0.0
      %v1763 = vmax.f32 %v1652, 0.0
      %v1764 = vmax.f32 %v1653, 0.0
      %v1765 = vmax.f32 %v1654, 0.0
      %v1766 = vmax.f32 %v1655, 0.0
      %v1767 = vmax.f32 %v1656, 0.0
      %v1768 = vmax.f32 %v1657, 0.0
      %v1769 = vmax.f32 %v1658, 0.0
      %v1770 = vmax.f32 %v1659, 0.0
      %v1771 = vmax.f32 %v1660, 0.0
      %v1772 = vmax.f32 %v1661, 0.0
      %v1773 = vmax.f32 %v1662, 0.0
      %v1774 = vmax.f32 %v1663, 0.0
      %v1775 = vmax.f32 %v1664, 0.0
      %v1776 = vmax.f32 %v1665, 0.0
      %v1777 = vmax.f32 %v1666, 0.0
      %v1778 = vmax.f32 %v1667, 0.0
      %v1779 = vmax.f32 %v1668, 0.0
      %v1780 = vmax.f32 %v1669, 0.0
      %v1781 = vmax.f32 %v1670, 0.0
      %v1782 = vmax.f32 %v1671, 0.0
      %v1783 = vmax.f32 %v1672, 0.0
      %v1784 = vmax.f32 %v1673, 0.0
      %v1785 = vmax.f32 %v1674, 0.0
      %v1786 = vmax.f32 %v1675, 0.0
      %v1787 = vmax.f32 %v1676, 0.0
      %v1788 = vmax.f32 %v1677, 0.0
      %1789 = vst [vmem:[#allocation8] sm:$0xff] %v1678
      %1790 = vst [vmem:[#allocation8 + $0x8] sm:$0xff] %v1679
      %1791 = vst [vmem:[#allocation8 + $0x10] sm:$0xff] %v1680
      %1792 = vst [vmem:[#allocation8 + $0x18] sm:$0xff] %v1681
      %1793 = vst [vmem:[#allocation8 + $0x20] sm:$0xff] %v1682
      %1794 = vst [vmem:[#allocation8 + $0x28] sm:$0xff] %v1683
      %1795 = vst [vmem:[#allocation8 + $0x30] sm:$0xff] %v1684
      %1796 = vst [vmem:[#allocation8 + $0x38] sm:$0xff] %v1685
      %1797 = vst [vmem:[#allocation8 + $0x40] sm:$0xff] %v1686
      %1798 = vst [vmem:[#allocation8 + $0x48] sm:$0xff] %v1687
      %1799 = vst [vmem:[#allocation8 + $0x50] sm:$0xff] %v1688
      %1800 = vst [vmem:[#allocation8 + $0x58] sm:$0xff] %v1689
      %1801 = vst [vmem:[#allocation8 + $0x60] sm:$0xff] %v1690
      %1802 = vst [vmem:[#allocation8 + $0x68] sm:$0xff] %v1691
      %1803 = vst [vmem:[#allocation8 + $0x70] sm:$0xff] %v1692
      %1804 = vst [vmem:[#allocation8 + $0x78] sm:$0xff] %v1693
      %1805 = vst [vmem:[#allocation8 + $0x80] sm:$0xff] %v1694
      %1806 = vst [vmem:[#allocation8 + $0x88] sm:$0xff] %v1695
      %1807 = vst [vmem:[#allocation8 + $0x90] sm:$0xff] %v1696
      %1808 = vst [vmem:[#allocation8 + $0x98] sm:$0xff] %v1697
      %1809 = vst [vmem:[#allocation8 + $0xa0] sm:$0xff] %v1698
      %1810 = vst [vmem:[#allocation8 + $0xa8] sm:$0xff] %v1699
      %1811 = vst [vmem:[#allocation8 + $0xb0] sm:$0xff] %v1700
      %1812 = vst [vmem:[#allocation8 + $0xb8] sm:$0xff] %v1701
      %1813 = vst [vmem:[#allocation8 + $0xc0] sm:$0xff] %v1702
      %1814 = vst [vmem:[#allocation8 + $0xc8] sm:$0xff] %v1703
      %1815 = vst [vmem:[#allocation8 + $0xd0] sm:$0xff] %v1704
      %1816 = vst [vmem:[#allocation8 + $0xd8] sm:$0xff] %v1705
      %1817 = vst [vmem:[#allocation8 + $0xe0] sm:$0xff] %v1706
      %1818 = vst [vmem:[#allocation8 + $0xe8] sm:$0xff] %v1707
      %1819 = vst [vmem:[#allocation8 + $0xf0] sm:$0xff] %v1708
      %1820 = vst [vmem:[#allocation8 + $0xf8] sm:$0xff] %v1709
      %1821 = vst [vmem:[#allocation8 + $0x100] sm:$0xff] %v1710
      %1822 = vst [vmem:[#allocation8 + $0x108] sm:$0xff] %v1711
      %1823 = vst [vmem:[#allocation8 + $0x110] sm:$0xff] %v1712
      %1824 = vst [vmem:[#allocation8 + $0x118] sm:$0xff] %v1713
      %1825 = vst [vmem:[#allocation8 + $0x120] sm:$0xff] %v1714
      %1826 = vst [vmem:[#allocation8 + $0x128] sm:$0xff] %v1715
      %1827 = vst [vmem:[#allocation8 + $0x130] sm:$0xff] %v1716
      %1828 = vst [vmem:[#allocation8 + $0x138] sm:$0xff] %v1717
      %1829 = vst [vmem:[#allocation8 + $0x140] sm:$0xff] %v1718
      %1830 = vst [vmem:[#allocation8 + $0x148] sm:$0xff] %v1719
      %1831 = vst [vmem:[#allocation8 + $0x150] sm:$0xff] %v1720
      %1832 = vst [vmem:[#allocation8 + $0x158] sm:$0xff] %v1721
      %1833 = vst [vmem:[#allocation8 + $0x160] sm:$0xff] %v1722
      %1834 = vst [vmem:[#allocation8 + $0x168] sm:$0xff] %v1723
      %1835 = vst [vmem:[#allocation8 + $0x170] sm:$0xff] %v1724
      %1836 = vst [vmem:[#allocation8 + $0x178] sm:$0xff] %v1725
      %1837 = vst [vmem:[#allocation8 + $0x180] sm:$0xff] %v1726
      %1838 = vst [vmem:[#allocation8 + $0x188] sm:$0xff] %v1727
      %1839 = vst [vmem:[#allocation8 + $0x190] sm:$0xff] %v1728
      %1840 = vst [vmem:[#allocation8 + $0x198] sm:$0xff] %v1729
      %1841 = vst [vmem:[#allocation8 + $0x1a0] sm:$0xff] %v1730
      %1842 = vst [vmem:[#allocation8 + $0x1a8] sm:$0xff] %v1731
      %1843 = vst [vmem:[#allocation8 + $0x1b0] sm:$0xff] %v1732
      %1844 = vst [vmem:[#allocation8 + $0x1b8] sm:$0xff] %v1733
      %1845 = vst [vmem:[#allocation8 + $0x1c0] sm:$0xff] %v1734
      %1846 = vst [vmem:[#allocation8 + $0x1c8] sm:$0xff] %v1735
      %1847 = vst [vmem:[#allocation8 + $0x1d0] sm:$0xff] %v1736
      %1848 = vst [vmem:[#allocation8 + $0x1d8] sm:$0xff] %v1737
      %1849 = vst [vmem:[#allocation8 + $0x1e0] sm:$0xff] %v1738
      %1850 = vst [vmem:[#allocation8 + $0x1e8] sm:$0xff] %v1739
      %1851 = vst [vmem:[#allocation8 + $0x1f0] sm:$0xff] %v1740
      %1852 = vst [vmem:[#allocation8 + $0x1f8] sm:$0xff] %v1741
      %1853 = vst [vmem:[#allocation8 + $0x200] sm:$0xff] %v1742
      %1854 = vst [vmem:[#allocation8 + $0x208] sm:$0xff] %v1743
      %1855 = vst [vmem:[#allocation8 + $0x210] sm:$0xff] %v1744
      %1856 = vst [vmem:[#allocation8 + $0x218] sm:$0xff] %v1745
      %1857 = vst [vmem:[#allocation8 + $0x220] sm:$0xff] %v1746
      %1858 = vst [vmem:[#allocation8 + $0x228] sm:$0xff] %v1747
      %1859 = vst [vmem:[#allocation8 + $0x230] sm:$0xff] %v1748
      %1860 = vst [vmem:[#allocation8 + $0x238] sm:$0xff] %v1749
      %1861 = vst [vmem:[#allocation8 + $0x240] sm:$0xff] %v1750
      %1862 = vst [vmem:[#allocation8 + $0x248] sm:$0xff] %v1751
      %1863 = vst [vmem:[#allocation8 + $0x250] sm:$0xff] %v1752
      %1864 = vst [vmem:[#allocation8 + $0x258] sm:$0xff] %v1753
      %1865 = vst [vmem:[#allocation8 + $0x260] sm:$0xff] %v1754
      %1866 = vst [vmem:[#allocation8 + $0x268] sm:$0xff] %v1755
      %1867 = vst [vmem:[#allocation8 + $0x270] sm:$0xff] %v1756
      %1868 = vst [vmem:[#allocation8 + $0x278] sm:$0xff] %v1757
      %1869 = vst [vmem:[#allocation8 + $0x280] sm:$0xff] %v1758
      %1870 = vst [vmem:[#allocation8 + $0x288] sm:$0xff] %v1759
      %1871 = vst [vmem:[#allocation8 + $0x290] sm:$0xff] %v1760
      %1872 = vst [vmem:[#allocation8 + $0x298] sm:$0xff] %v1761
      %1873 = vst [vmem:[#allocation8 + $0x2a0] sm:$0xff] %v1762
      %1874 = vst [vmem:[#allocation8 + $0x2a8] sm:$0xff] %v1763
      %1875 = vst [vmem:[#allocation8 + $0x2b0] sm:$0xff] %v1764
      %1876 = vst [vmem:[#allocation8 + $0x2b8] sm:$0xff] %v1765
      %1877 = vst [vmem:[#allocation8 + $0x2c0] sm:$0xff] %v1766
      %1878 = vst [vmem:[#allocation8 + $0x2c8] sm:$0xff] %v1767
      %1879 = vst [vmem:[#allocation8 + $0x2d0] sm:$0xff] %v1768
      %1880 = vst [vmem:[#allocation8 + $0x2d8] sm:$0xff] %v1769
      %1881 = vst [vmem:[#allocation8 + $0x2e0] sm:$0xff] %v1770
      %1882 = vst [vmem:[#allocation8 + $0x2e8] sm:$0xff] %v1771
      %1883 = vst [vmem:[#allocation8 + $0x2f0] sm:$0xff] %v1772
      %1884 = vst [vmem:[#allocation8 + $0x2f8] sm:$0xff] %v1773
      %1885 = vst [vmem:[#allocation8 + $0x300] sm:$0xff] %v1774
      %1886 = vst [vmem:[#allocation8 + $0x308] sm:$0xff] %v1775
      %1887 = vst [vmem:[#allocation8 + $0x310] sm:$0xff] %v1776
      %1888 = vst [vmem:[#allocation8 + $0x318] sm:$0xff] %v1777
      %1889 = vst [vmem:[#allocation8 + $0x320] sm:$0xff] %v1778
      %1890 = vst [vmem:[#allocation8 + $0x328] sm:$0xff] %v1779
      %1891 = vst [vmem:[#allocation8 + $0x330] sm:$0xff] %v1780
      %1892 = vst [vmem:[#allocation8 + $0x338] sm:$0xff] %v1781
      %1893 = vst [vmem:[#allocation8 + $0x340] sm:$0xff] %v1782
      %1894 = vst [vmem:[#allocation8 + $0x348] sm:$0xff] %v1783
      %1895 = vst [vmem:[#allocation8 + $0x350] sm:$0xff] %v1784
      %1896 = vst [vmem:[#allocation8 + $0x358] sm:$0xff] %v1785
      %1897 = vst [vmem:[#allocation8 + $0x360] sm:$0xff] %v1786
      %1898 = vst [vmem:[#allocation8 + $0x368] sm:$0xff] %v1787
      %1899 = vst [vmem:[#allocation8 + $0x370] sm:$0x3] %v1788
    $region29: #{tpu_custom_call.1} parent=1 // pred_fallthru
      _
    // Predicated region
    $region30: #{tpu_custom_call.1} parent=1 // pred_check
      _
    $region31: #{tpu_custom_call.1} parent=1 // pred_check_branch
      %1901 = sbr.rel (0) target = $region33
    $region32: #{tpu_custom_call.1} parent=1 // pred_region
      %1903 = vsyncadd [#allocation5], 0
      %s1904 = sshll.u32 [#allocation8], 4
      %s1905 = int_to_ptr.vmem [resolvable:$true] %s1904
      %s1906 = sshll.u32 %s3, 4
      %s1907 = int_to_ptr.hbm [resolvable:$true] %s1906
      %1912 = dma.vmem_to_hbm [thread:$0]  %s1905, 14208, %s1907, [#allocation5], 128, 128, 8
    $region33: #{tpu_custom_call.1} parent=1 // pred_fallthru
      _
    // Predicated region
    $region34: #{tpu_custom_call.1} parent=1 // pred_check
      _
    $region35: #{tpu_custom_call.1} parent=1 // pred_check_branch
      %1914 = sbr.rel (0) target = $region37
    $region36: #{tpu_custom_call.1} parent=1 // pred_region
      %1916 = dma.done [#allocation5], 14208
    $region37: #{tpu_custom_call.1} parent=1 // pred_fallthru
      _
    %1917 = vsyncpa [#allocation4], 1
    %1918 = vsyncpa [#allocation7], 1
    %1919 = vsyncpa [#allocation5], 1

</llo_original>
